<compile_context>
chip_gen: v7x
topology: tpu7x:2x2x1
jax: 0.10.0
libtpu: 0.0.40
codegen_flags: <defaults>
</compile_context>

<pallas_src>
import functools

import jax
import jax.numpy as jnp
from jax.experimental import pallas as pl
from jax.experimental.pallas import tpu as pltpu


# ------------------------------ fused kernel ------------------------------- #

def _attn_proj_kernel(q_ref, k_ref, w_ref, b_ref, o_ref, *, scale):
    """One grid step owns `rows = Pg*N*hd/C` consecutive output rows.

    q_ref/k_ref: (1, Pg, N, hd)  -- the Pg (head, batch) pairs this step owns,
                                    already in the module's pair order p=h*B+b.
    w_ref: (C, C) (in, out) == torch proj.weight.T;  b_ref: (1, C);
    o_ref: (1, rows, C).
    """
    _, Pg, N, hd = q_ref.shape
    C = w_ref.shape[0]
    rows = (Pg * N * hd) // C

    # v == k in this module; fold the softmax scale into q (touches Pg*N*hd
    # elements instead of the Pg*N*N score tensor).
    q = q_ref[0].astype(jnp.float32) * scale                    # (Pg, N, hd)
    k = k_ref[0].astype(jnp.float32)                            # (Pg, N, hd)

    # Batched QK^T over all owned pairs (no per-head micro-matmuls, no k.T
    # materialized -- contract the last dims).
    s = jnp.einsum('mnd,mkd->mnk', q, k,
                   preferred_element_type=jnp.float32)          # (Pg, N, N)
    s = s - jnp.max(s, axis=-1, keepdims=True)
    p = jnp.exp(s)
    # reciprocal + multiply instead of divide (EUP slot, VPU-free). ~1e-4
    # relative error vs an exact divide; switch to jnp division if bit-level
    # parity with the PyTorch module is required.
    p = p * pl.reciprocal(jnp.sum(p, axis=-1, keepdims=True), approx=True)

    a = jnp.einsum('mnk,mkd->mnd', p, k,
                   preferred_element_type=jnp.float32)          # (Pg, N, hd)

    # The module's (H,B,N,hd) flatten == row-major flatten of the pair-major
    # attention output: assemble the (rows, C) pre-projection activation fully
    # in registers (no VMEM scratch, no scatter stores).
    y = a.reshape(rows, C)

    # Output projection for the rows owned by this step, one lane-dense store.
    out = jnp.dot(y, w_ref[...], preferred_element_type=jnp.float32) + b_ref[...]
    o_ref[0, :, :] = out.astype(o_ref.dtype)


# -------------------------------- wrapper ----------------------------------- #

def attention_forward(kv, x, proj_w, proj_b, num_heads):
    """kv, x: (B, N, C).  proj_w: (C, C) laid out (in, out) == torch proj.weight.T.
    proj_b: (C,).  Returns (B, N, C)."""
    B, N, C = x.shape
    H = num_heads
    assert C % H == 0, "C must be divisible by num_heads"
    hd = C // H
    scale = hd ** -0.5

    # Grid split: output rows [g*rows_pg, (g+1)*rows_pg) need exactly the
    # (head, batch) pairs p = h*B + b in [g*Pg, (g+1)*Pg).  When H % B == 0
    # this is a clean per-output-batch split (G = B, real megacore win on v7x);
    # otherwise fall back to a single step computing everything (general map).
    G = B if (H % B == 0) else 1
    Pg = (B * H) // G
    rows_pg = (B * N) // G

    # One-time tiny layout plumbing: arrange q/k pair-major, (G, Pg, N, hd),
    # so each grid step's BlockSpec hands it exactly the pairs it owns.
    def to_pairs(t):
        return jnp.transpose(t.reshape(B, N, H, hd),
                             (2, 0, 1, 3)).reshape(G, Pg, N, hd)

    qp = to_pairs(x)
    kp = to_pairs(kv)                                           # k == v

    kernel = functools.partial(_attn_proj_kernel, scale=scale)
    out = pl.pallas_call(
        kernel,
        out_shape=jax.ShapeDtypeStruct((G, rows_pg, C), x.dtype),
        grid=(G,),
        in_specs=[
            pl.BlockSpec((1, Pg, N, hd), lambda g: (g, 0, 0, 0)),   # q pairs
            pl.BlockSpec((1, Pg, N, hd), lambda g: (g, 0, 0, 0)),   # k (=v) pairs
            pl.BlockSpec((C, C), lambda g: (0, 0)),                 # proj weight
            pl.BlockSpec((1, C), lambda g: (0, 0)),                 # proj bias
        ],
        out_specs=pl.BlockSpec((1, rows_pg, C), lambda g: (g, 0, 0)),
        compiler_params=pltpu.CompilerParams(
            dimension_semantics=("parallel",)),
    )(qp, kp, proj_w, proj_b.reshape(1, C))

    # Rows are already in global order; this reshape is free (metadata only).
    return out.reshape(B, N, C)


# --------------------------- pure-JAX reference ----------------------------- #

def reference_forward(kv, x, proj_w, proj_b, num_heads):
    B, N, C = x.shape
    hd = C // num_heads
    scale = hd ** -0.5
    k = jnp.transpose(kv.reshape(B, N, 1, num_heads, hd), (2, 0, 3, 1, 4))  # (1,B,H,N,hd)
    q = jnp.transpose(x.reshape(B, N, 1, num_heads, hd), (2, 0, 3, 1, 4))
    attn = jnp.einsum('obhnd,obhmd->obhnm', q, k) * scale
    attn = jax.nn.softmax(attn, axis=-1)
    y = jnp.einsum('obhnm,obhmd->obhnd', attn, k)                 # v == k
    y = jnp.transpose(y, (0, 2, 1, 3, 4)).reshape(B, N, C)        # (1,H,B,N,hd) -> (B,N,C)
    return y @ proj_w + proj_b


# --------------------------------- main ------------------------------------ #

if __name__ == "__main__":
    B, N, C = 2, 8, 32
    num_heads = 8

    key = jax.random.PRNGKey(0)
    k_kv, k_x, k_w, k_b = jax.random.split(key, 4)

    kv = jax.random.normal(k_kv, (B, N, C), dtype=jnp.float32)
    x = jax.random.normal(k_x, (B, N, C), dtype=jnp.float32)

    # Deterministic synthetic nn.Linear(dim, dim) params; proj_w == weight.T (in, out).
    bound = 1.0 / (C ** 0.5)
    proj_w = jax.random.uniform(k_w, (C, C), dtype=jnp.float32,
                                minval=-bound, maxval=bound)
    proj_b = jax.random.uniform(k_b, (C,), dtype=jnp.float32,
                                minval=-bound, maxval=bound)

    fwd = jax.jit(attention_forward, static_argnames=("num_heads",))
    out = jax.block_until_ready(fwd(kv, x, proj_w, proj_b, num_heads=num_heads))

    ref = reference_forward(kv, x, proj_w, proj_b, num_heads)
    assert out.shape == (B, N, C)
    # Tolerance accounts for the approximate (EUP) reciprocal in the softmax
    # denominator (~1e-4-level relative error); structural/semantic bugs would
    # show up as O(0.1-1) deviations.
    assert jnp.allclose(out, ref, atol=5e-3, rtol=5e-3), "mismatch vs reference"

    print("KERNEL_OK")
</pallas_src>

<mosaic_0001>
module attributes {stable_mosaic.version = 11 : i64} {
  func.func @_attn_proj_kernel(%arg0: i32, %arg1: memref<1x8x8x4xf32, #tpu.memory_space<vmem>>, %arg2: memref<1x8x8x4xf32, #tpu.memory_space<vmem>>, %arg3: memref<32x32xf32, #tpu.memory_space<vmem>>, %arg4: memref<1x32xf32, #tpu.memory_space<vmem>>, %arg5: memref<1x8x32xf32, #tpu.memory_space<vmem>>) attributes {dimension_semantics = [#tpu.dimension_semantics<parallel>], iteration_bounds = array<i64: 2>, scalar_prefetch = 0 : i64, scratch_operands = 0 : i64, tpu.core_type = #tpu.core_type<tc>, window_params = [{transform_indices = @transform_0, window_bounds = array<i64: 1, 8, 8, 4>}, {transform_indices = @transform_1, window_bounds = array<i64: 1, 8, 8, 4>}, {pipeline_mode = #tpu.pipeline_mode<synchronous>, transform_indices = @transform_2, window_bounds = array<i64: 32, 32>}, {pipeline_mode = #tpu.pipeline_mode<synchronous>, transform_indices = @transform_3, window_bounds = array<i64: 1, 32>}, {transform_indices = @transform_4, window_bounds = array<i64: 1, 8, 32>}]} {
    %c0 = arith.constant 0 : index
    %c0_0 = arith.constant 0 : index
    %c0_1 = arith.constant 0 : index
    %c0_2 = arith.constant 0 : index
    %0 = vector.load %arg1[%c0, %c0_0, %c0_1, %c0_2] : memref<1x8x8x4xf32, #tpu.memory_space<vmem>>, vector<1x8x8x4xf32>
    %1 = vector.shape_cast %0 : vector<1x8x8x4xf32> to vector<8x8x4xf32>
    %cst = arith.constant 5.000000e-01 : f32
    %2 = vector.broadcast %cst : f32 to vector<8x8x4xf32>
    %3 = arith.mulf %1, %2 : vector<8x8x4xf32>
    %c0_3 = arith.constant 0 : index
    %c0_4 = arith.constant 0 : index
    %c0_5 = arith.constant 0 : index
    %c0_6 = arith.constant 0 : index
    %4 = vector.load %arg2[%c0_3, %c0_4, %c0_5, %c0_6] : memref<1x8x8x4xf32, #tpu.memory_space<vmem>>, vector<1x8x8x4xf32>
    %5 = vector.shape_cast %4 : vector<1x8x8x4xf32> to vector<8x8x4xf32>
    "tpu.trace_start"() <{level = 10 : i32, message = "mnd,mkd->mnk"}> : () -> ()
    %cst_7 = arith.constant dense<0.000000e+00> : vector<8x8x8xf32>
    %6 = tpu.matmul %3, %5, %cst_7 {dimension_numbers = #tpu.dot_dimension_numbers<[2], [2], [1], [1], [0, 0, 0, 1, 1, 1], [0], [0]>} : vector<8x8x4xf32>, vector<8x8x4xf32>, vector<8x8x8xf32> -> vector<8x8x8xf32>
    "tpu.trace_stop"() : () -> ()
    %cst_8 = arith.constant dense<0xFF800000> : vector<8x8xf32>
    %7 = vector.multi_reduction <maximumf>, %6, %cst_8 [2] : vector<8x8x8xf32> to vector<8x8xf32>
    %8 = vector.shape_cast %7 : vector<8x8xf32> to vector<8x8x1xf32>
    %9 = vector.broadcast %8 : vector<8x8x1xf32> to vector<8x8x8xf32>
    %10 = arith.subf %6, %9 : vector<8x8x8xf32>
    %11 = math.exp %10 : vector<8x8x8xf32>
    %cst_9 = arith.constant dense<0.000000e+00> : vector<8x8xf32>
    %12 = vector.multi_reduction <add>, %11, %cst_9 [2] : vector<8x8x8xf32> to vector<8x8xf32>
    %13 = vector.shape_cast %12 : vector<8x8xf32> to vector<8x8x1xf32>
    %14 = tpu.reciprocal %13 {approx = true} : vector<8x8x1xf32> -> vector<8x8x1xf32>
    %15 = vector.broadcast %14 : vector<8x8x1xf32> to vector<8x8x8xf32>
    %16 = arith.mulf %11, %15 : vector<8x8x8xf32>
    "tpu.trace_start"() <{level = 10 : i32, message = "mnk,mkd->mnd"}> : () -> ()
    %cst_10 = arith.constant dense<0.000000e+00> : vector<8x8x4xf32>
    %17 = tpu.matmul %16, %5, %cst_10 {dimension_numbers = #tpu.dot_dimension_numbers<[2], [1], [1], [2], [0, 0, 0, 1, 1, 2], [0], [0]>} : vector<8x8x8xf32>, vector<8x8x4xf32>, vector<8x8x4xf32> -> vector<8x8x4xf32>
    "tpu.trace_stop"() : () -> ()
    %18 = vector.shape_cast %17 : vector<8x8x4xf32> to vector<8x32xf32>
    %c0_11 = arith.constant 0 : index
    %c0_12 = arith.constant 0 : index
    %19 = vector.load %arg3[%c0_11, %c0_12] : memref<32x32xf32, #tpu.memory_space<vmem>>, vector<32x32xf32>
    %cst_13 = arith.constant dense<0.000000e+00> : vector<8x32xf32>
    %20 = tpu.matmul %18, %19, %cst_13 {dimension_numbers = #tpu.dot_dimension_numbers<[1], [0], [0], [1], [0, 0, 1, 1], [], []>} : vector<8x32xf32>, vector<32x32xf32>, vector<8x32xf32> -> vector<8x32xf32>
    %c0_14 = arith.constant 0 : index
    %c0_15 = arith.constant 0 : index
    %21 = vector.load %arg4[%c0_14, %c0_15] : memref<1x32xf32, #tpu.memory_space<vmem>>, vector<1x32xf32>
    %22 = vector.broadcast %21 : vector<1x32xf32> to vector<8x32xf32>
    %23 = arith.addf %20, %22 : vector<8x32xf32>
    %c0_16 = arith.constant 0 : index
    %c0_17 = arith.constant 0 : index
    %c0_18 = arith.constant 0 : index
    %24 = vector.load %arg5[%c0_16, %c0_17, %c0_18] : memref<1x8x32xf32, #tpu.memory_space<vmem>>, vector<1x8x32xf32>
    %25 = vector.shape_cast %24 : vector<1x8x32xf32> to vector<8x32xf32>
    %26 = vector.shape_cast %23 : vector<8x32xf32> to vector<1x8x32xf32>
    tpu.vector_store %arg5[%c0_16, %c0_17, %c0_18], %26 {strides = array<i32>} : memref<1x8x32xf32, #tpu.memory_space<vmem>>, vector<1x8x32xf32>,
    return
  }
  func.func @transform_0(%arg0: i32) -> (i32, i32, i32, i32) {
    %c0_i32 = arith.constant 0 : i32
    %c0_i32_0 = arith.constant 0 : i32
    %c0_i32_1 = arith.constant 0 : i32
    %c0_i32_2 = arith.constant 0 : i32
    return %arg0, %c0_i32, %c0_i32_0, %c0_i32_1 : i32, i32, i32, i32
  }
  func.func @transform_1(%arg0: i32) -> (i32, i32, i32, i32) {
    %c0_i32 = arith.constant 0 : i32
    %c0_i32_0 = arith.constant 0 : i32
    %c0_i32_1 = arith.constant 0 : i32
    %c0_i32_2 = arith.constant 0 : i32
    return %arg0, %c0_i32, %c0_i32_0, %c0_i32_1 : i32, i32, i32, i32
  }
  func.func @transform_2(%arg0: i32) -> (i32, i32) {
    %c0_i32 = arith.constant 0 : i32
    %c0_i32_0 = arith.constant 0 : i32
    %c0_i32_1 = arith.constant 0 : i32
    return %c0_i32, %c0_i32_0 : i32, i32
  }
  func.func @transform_3(%arg0: i32) -> (i32, i32) {
    %c0_i32 = arith.constant 0 : i32
    %c0_i32_0 = arith.constant 0 : i32
    %c0_i32_1 = arith.constant 0 : i32
    return %c0_i32, %c0_i32_0 : i32, i32
  }
  func.func @transform_4(%arg0: i32) -> (i32, i32, i32) {
    %c0_i32 = arith.constant 0 : i32
    %c0_i32_0 = arith.constant 0 : i32
    %c0_i32_1 = arith.constant 0 : i32
    return %arg0, %c0_i32, %c0_i32_0 : i32, i32, i32
  }
}

</mosaic_0001>

<llo_original>
// kernel: attention_forward.1
$region0: #{attention_forward.1}
  #allocation0 [shape = 'u32[]', space=smem, size = 0x4, offset = 0x4, fixed_abs, tag = 'smem constant byte address 0x4 - core index']
  #allocation1 [shape = 'u32[144,128]{1,0:T(1,128)}', space=vmem, size = 0x12000, scoped, tag = 'internal scratch']
  %s0 = inlined_call_operand.vmem [shape: f32[2,8,8,4], index: 0, kind: input, shape index: {}]
  %s1 = inlined_call_operand.vmem [shape: f32[2,8,8,4], index: 1, kind: input, shape index: {}]
  %s2 = inlined_call_operand.vmem [shape: f32[32,32], index: 2, kind: input, shape index: {}]
  %s3 = inlined_call_operand.vmem [shape: f32[1,32], index: 3, kind: input, shape index: {}]
  %s4 = inlined_call_operand.hbm [shape: f32[2,8,32], index: 4, kind: output, shape index: {}]
  %s5 = sld [smem:[#allocation0]]
  $region49: #{attention_forward.1} parent=0
    _
  %s7 = ssub.s32 1, %s5
  %s8 = scalar_select 0, %s7, %s5
  $region1: #{attention_forward.1} parent=0
    #allocation2 [shape = 'u8[8192]{0}', space=vmem, size = 0x2000, scoped, tag = 'output window, operand 0']
    #allocation3 [shape = 's32[2]{0}', space=sflag, size = 0x8, scoped, tag = 'scoped memory for attention_forward.1']
    %9 = vsyncpa [#allocation3], 0
    %s10 = scalar_lea.sflag [#allocation3], 1
    %11 = vsyncpa %s10, 0
    loop: start=0, step=1, limit=4
    $region2: #{attention_forward.1} parent=1 // loop_pre_header
      _
    $region3: #{attention_forward.1} parent=1 // loop_header
      %s13 = sphi 0, %s17
      %p14 = scmp.ge.s32.totalorder %s13, 4
      %s23 = sphi 0, %s25
      %s26 = sphi 0, %s23
      %s27 = sphi 0, %s26
      %s43 = sphi 0, %s27
      %s49 = sphi 0, %s51
      %s52 = sphi 0, %s49
      %s53 = sphi 0, %s52
      %s69 = sphi 0, %s53
      %s73 = sphi 0, %s73
      %s75 = sphi 0, %s73
      %s76 = sphi 0, %s75
      %s90 = sphi 0, %s76
      %s94 = sphi 0, %s94
      %s96 = sphi 0, %s94
      %s97 = sphi 0, %s96
      %s111 = sphi 0, %s97
      %s117 = sphi 0, %s119
      %s120 = sphi 0, %s117
      %s121 = sphi 0, %s120
      %s137 = sphi 0, %s121
    $region4: #{attention_forward.1} parent=1 // loop_header_branch
      %16 = sbr.rel (%p14) target = $region8
    $region5: #{attention_forward.1} parent=1 // loop_body
      %s18 = ssub.s32 %s13, 1
      %s19 = ssub.s32 %s13, 2
      %s20 = sadd.s32 %s13, 1
      %s21 = ssub.s32 %s13, %s20
      %p22 = scmp.eq.s32.totalorder %s21, 0
      %s24 = sadd.s32 %s23, 1
      %s25 = scalar_select %p22, %s23, %s24
      %p28 = pneg %p22
      %p29 = scmp.eq.s32.totalorder %s13, 1
      %p30 = por %p28, %p29
      %p31 = scmp.ne.s32.totalorder %s23, %s26
      %p32 = scmp.eq.s32.totalorder %s13, 0
      %p33 = por %p31, %p32
      %p34 = scmp.ne.s32.totalorder %s23, %s26
      %p35 = scmp.eq.s32.totalorder %s18, 1
      %p36 = por %p34, %p35
      %p37 = scmp.ne.s32.totalorder %s26, %s27
      %p38 = scmp.eq.s32.totalorder %s18, 0
      %p39 = por %p37, %p38
      %p40 = scmp.ne.s32.totalorder %s26, %s27
      %p41 = scmp.eq.s32.totalorder %s19, 1
      %p42 = por %p40, %p41
      %p44 = scmp.ne.s32.totalorder %s27, %s43
      %p45 = scmp.eq.s32.totalorder %s19, 0
      %p46 = por %p44, %p45
      %s47 = ssub.s32 %s13, %s20
      %p48 = scmp.eq.s32.totalorder %s47, 0
      %s50 = sadd.s32 %s49, 1
      %s51 = scalar_select %p48, %s49, %s50
      %p54 = pneg %p48
      %p55 = scmp.eq.s32.totalorder %s13, 1
      %p56 = por %p54, %p55
      %p57 = scmp.ne.s32.totalorder %s49, %s52
      %p58 = scmp.eq.s32.totalorder %s13, 0
      %p59 = por %p57, %p58
      %p60 = scmp.ne.s32.totalorder %s49, %s52
      %p61 = scmp.eq.s32.totalorder %s18, 1
      %p62 = por %p60, %p61
      %p63 = scmp.ne.s32.totalorder %s52, %s53
      %p64 = scmp.eq.s32.totalorder %s18, 0
      %p65 = por %p63, %p64
      %p66 = scmp.ne.s32.totalorder %s52, %s53
      %p67 = scmp.eq.s32.totalorder %s19, 1
      %p68 = por %p66, %p67
      %p70 = scmp.ne.s32.totalorder %s53, %s69
      %p71 = scmp.eq.s32.totalorder %s19, 0
      %p72 = por %p70, %p71
      %s74 = sadd.s32 %s73, 1
      %p77 = scmp.eq.s32.totalorder %s13, 1
      %p78 = scmp.ne.s32.totalorder %s73, %s75
      %p79 = scmp.eq.s32.totalorder %s13, 0
      %p80 = por %p78, %p79
      %p81 = scmp.ne.s32.totalorder %s73, %s75
      %p82 = scmp.eq.s32.totalorder %s18, 1
      %p83 = por %p81, %p82
      %p84 = scmp.ne.s32.totalorder %s75, %s76
      %p85 = scmp.eq.s32.totalorder %s18, 0
      %p86 = por %p84, %p85
      %p87 = scmp.ne.s32.totalorder %s75, %s76
      %p88 = scmp.eq.s32.totalorder %s19, 1
      %p89 = por %p87, %p88
      %p91 = scmp.ne.s32.totalorder %s76, %s90
      %p92 = scmp.eq.s32.totalorder %s19, 0
      %p93 = por %p91, %p92
      %s95 = sadd.s32 %s94, 1
      %p98 = scmp.eq.s32.totalorder %s13, 1
      %p99 = scmp.ne.s32.totalorder %s94, %s96
      %p100 = scmp.eq.s32.totalorder %s13, 0
      %p101 = por %p99, %p100
      %p102 = scmp.ne.s32.totalorder %s94, %s96
      %p103 = scmp.eq.s32.totalorder %s18, 1
      %p104 = por %p102, %p103
      %p105 = scmp.ne.s32.totalorder %s96, %s97
      %p106 = scmp.eq.s32.totalorder %s18, 0
      %p107 = por %p105, %p106
      %p108 = scmp.ne.s32.totalorder %s96, %s97
      %p109 = scmp.eq.s32.totalorder %s19, 1
      %p110 = por %p108, %p109
      %p112 = scmp.ne.s32.totalorder %s97, %s111
      %p113 = scmp.eq.s32.totalorder %s19, 0
      %p114 = por %p112, %p113
      %s115 = ssub.s32 %s13, %s20
      %p116 = scmp.eq.s32.totalorder %s115, 0
      %s118 = sadd.s32 %s117, 1
      %s119 = scalar_select %p116, %s117, %s118
      %p122 = pneg %p116
      %p123 = scmp.eq.s32.totalorder %s13, 1
      %p124 = por %p122, %p123
      %p125 = scmp.ne.s32.totalorder %s117, %s120
      %p126 = scmp.eq.s32.totalorder %s13, 0
      %p127 = por %p125, %p126
      %p128 = scmp.ne.s32.totalorder %s117, %s120
      %p129 = scmp.eq.s32.totalorder %s18, 1
      %p130 = por %p128, %p129
      %p131 = scmp.ne.s32.totalorder %s120, %s121
      %p132 = scmp.eq.s32.totalorder %s18, 0
      %p133 = por %p131, %p132
      %p134 = scmp.ne.s32.totalorder %s120, %s121
      %p135 = scmp.eq.s32.totalorder %s19, 1
      %p136 = por %p134, %p135
      %p138 = scmp.ne.s32.totalorder %s121, %s137
      %p139 = scmp.eq.s32.totalorder %s19, 0
      %p140 = por %p138, %p139
      %p141 = scmp.le.s32.totalorder 1, %s13
      %p142 = scmp.lt.s32.totalorder %s13, 3
      %p143 = pnand %p141, %p142
      %p144 = pneg %p143
      // Predicated region
      $region9: #{attention_forward.1} parent=5 // pred_check
        _
      $region10: #{attention_forward.1} parent=5 // pred_check_branch
        %146 = sbr.rel (%p143) target = $region12
      $region11: #{attention_forward.1} parent=5 // pred_region
        %s147 = ssub.s32 %s13, 1
        // Predicated region
        $region13: #{attention_forward.1} parent=11 // pred_check
          %p148 = pneg %p86
        $region14: #{attention_forward.1} parent=11 // pred_check_branch
          %150 = sbr.rel (%p148) target = $region16
        $region15: #{attention_forward.1} parent=11 // pred_region
          _
        $region16: #{attention_forward.1} parent=11 // pred_fallthru
          _
        // Predicated region
        $region17: #{attention_forward.1} parent=11 // pred_check
          %p151 = pneg %p107
        $region18: #{attention_forward.1} parent=11 // pred_check_branch
          %153 = sbr.rel (%p151) target = $region20
        $region19: #{attention_forward.1} parent=11 // pred_region
          _
        $region20: #{attention_forward.1} parent=11 // pred_fallthru
          _
      $region12: #{attention_forward.1} parent=5 // pred_fallthru
        _
      %p154 = scmp.lt.s32.totalorder %s13, 2
      // Predicated region
      $region21: #{attention_forward.1} parent=5 // pred_check
        %p155 = pneg %p154
      $region22: #{attention_forward.1} parent=5 // pred_check_branch
        %157 = sbr.rel (%p155) target = $region24
      $region23: #{attention_forward.1} parent=5 // pred_region
        // Predicated region
        $region25: #{attention_forward.1} parent=23 // pred_check
          %p158 = pneg %p33
        $region26: #{attention_forward.1} parent=23 // pred_check_branch
          %160 = sbr.rel (%p158) target = $region28
        $region27: #{attention_forward.1} parent=23 // pred_region
          %p161 = scmp.lt.s32.totalorder %s13, 1
          %s162 = scalar_select %p161, %s13, 1
          %s163 = smul.addr %s162, 8
          %s164 = smul.addr %s163, 8
          %s165 = scalar_lea.vmem %s0, %s164
        $region28: #{attention_forward.1} parent=23 // pred_fallthru
          _
        // Predicated region
        $region29: #{attention_forward.1} parent=23 // pred_check
          %p166 = pneg %p59
        $region30: #{attention_forward.1} parent=23 // pred_check_branch
          %168 = sbr.rel (%p166) target = $region32
        $region31: #{attention_forward.1} parent=23 // pred_region
          %p169 = scmp.lt.s32.totalorder %s13, 1
          %s170 = scalar_select %p169, %s13, 1
          %s171 = smul.addr %s170, 8
          %s172 = smul.addr %s171, 8
          %s173 = scalar_lea.vmem %s1, %s172
        $region32: #{attention_forward.1} parent=23 // pred_fallthru
          _
      $region24: #{attention_forward.1} parent=5 // pred_fallthru
        _
      %p174 = scmp.le.s32.totalorder 1, %s13
      %p175 = scmp.lt.s32.totalorder %s13, 3
      %p176 = pnand %p174, %p175
      %p177 = pneg %p176
      // Predicated region
      $region33: #{attention_forward.1} parent=5 // pred_check
        _
      $region34: #{attention_forward.1} parent=5 // pred_check_branch
        %179 = sbr.rel (%p176) target = $region36
      $region35: #{attention_forward.1} parent=5 // pred_region
        %s180 = ssub.s32 %s13, 1
        %p181 = scmp.lt.s32.totalorder %s18, 1
        %s182 = scalar_select %p181, %s18, 1
        %s183 = smul.addr %s182, 8
        %s184 = smul.addr %s183, 8
        %s185 = scalar_lea.vmem %s0, %s184
        %p186 = pneg %p39
        %p187 = pneg %p36
        %p188 = scmp.lt.s32.totalorder %s18, 1
        %s189 = scalar_select %p188, %s18, 1
        %s190 = smul.addr %s189, 8
        %s191 = smul.addr %s190, 8
        %s192 = scalar_lea.vmem %s1, %s191
        %p193 = pneg %p65
        %p194 = pneg %p62
        %p195 = pneg %p86
        %p196 = pneg %p83
        %p197 = pneg %p107
        %p198 = pneg %p104
        %p199 = pneg %p133
        %p200 = pneg %p130
        %s201 = sand.u32 %s120, 1
        %s202 = scalar_lea.sflag [#allocation3], %s201
        %s203 = sand.u32 %s120, 1
        %s204 = smul.addr %s203, 8
        %s205 = scalar_lea.vmem [#allocation2], %s204
        %p206 = scmp.lt.s32.totalorder %s18, 1
        %s207 = scalar_select %p206, %s18, 1
        %s208 = smul.addr %s207, 8
        %s209 = smul.addr %s208, 8
        %s210 = scalar_lea.vmem %s0, %s209
        %p211 = scmp.lt.s32.totalorder %s18, 1
        %s212 = scalar_select %p211, %s18, 1
        %s213 = smul.addr %s212, 8
        %s214 = smul.addr %s213, 8
        %s215 = scalar_lea.vmem %s1, %s214
        %v216 = vld [vmem:[%s210] sm:$0xff]
        %v217 = vld [vmem:[%s210 + $0x8] sm:$0xff]
        %v218 = vld [vmem:[%s210 + $0x10] sm:$0xff]
        %v219 = vld [vmem:[%s210 + $0x18] sm:$0xff]
        %v220 = vld [vmem:[%s210 + $0x20] sm:$0xff]
        %v221 = vld [vmem:[%s210 + $0x28] sm:$0xff]
        %v222 = vld [vmem:[%s210 + $0x30] sm:$0xff]
        %v223 = vld [vmem:[%s210 + $0x38] sm:$0xff]
        %v224 = vmul.f32 %v216, 0.5
        %v225 = vmul.f32 %v217, 0.5
        %v226 = vmul.f32 %v218, 0.5
        %v227 = vmul.f32 %v219, 0.5
        %v228 = vmul.f32 %v220, 0.5
        %v229 = vmul.f32 %v221, 0.5
        %v230 = vmul.f32 %v222, 0.5
        %v231 = vmul.f32 %v223, 0.5
        %v232 = vld [vmem:[%s215] sm:$0xff]
        %v233 = vld [vmem:[%s215 + $0x8] sm:$0xff]
        %v234 = vld [vmem:[%s215 + $0x10] sm:$0xff]
        %v235 = vld [vmem:[%s215 + $0x18] sm:$0xff]
        %v236 = vld [vmem:[%s215 + $0x20] sm:$0xff]
        %v237 = vld [vmem:[%s215 + $0x28] sm:$0xff]
        %v238 = vld [vmem:[%s215 + $0x30] sm:$0xff]
        %v239 = vld [vmem:[%s215 + $0x38] sm:$0xff]
        %vm240 = vcmask 31744
        %v242 = vsel %vm240, %v224, 0
        %v245 = vsel %vm240, %v232, 0
        %247 = vmatprep.subr.mxu0 0.0
        %248 = vmatpush1.xpose.msra.mxu0 %v245
        %249 = vmatprep.subr.mxu0 0.0
        %250 = vmatpush1.xpose.msra.mxu0 0.0
        %251 = vmatprep.subr.mxu0 0.0
        %252 = vmatpush1.xpose.msra.mxu0 0.0
        %253 = vmatprep.subr.mxu0 0.0
        %254 = vmatpush1.xpose.msra.mxu0 0.0
        %255 = vmatprep.subr.mxu0 0.0
        %256 = vmatpush1.xpose.msra.mxu0 0.0
        %257 = vmatprep.subr.mxu0 0.0
        %258 = vmatpush1.xpose.msra.mxu0 0.0
        %259 = vmatprep.subr.mxu0 0.0
        %260 = vmatpush1.xpose.msra.mxu0 0.0
        %261 = vmatprep.subr.mxu0 0.0
        %262 = vmatpush1.xpose.msra.mxu0 0.0
        %263 = vmatprep.subr.mxu0 0.0
        %264 = vmatpush1.xpose.msra.mxu0 0.0
        %265 = vmatprep.subr.mxu0 0.0
        %266 = vmatpush1.xpose.msra.mxu0 0.0
        %267 = vmatprep.subr.mxu0 0.0
        %268 = vmatpush1.xpose.msra.mxu0 0.0
        %269 = vmatprep.subr.mxu0 0.0
        %270 = vmatpush1.xpose.msra.mxu0 0.0
        %271 = vmatprep.subr.mxu0 0.0
        %272 = vmatpush1.xpose.msra.mxu0 0.0
        %273 = vmatprep.subr.mxu0 0.0
        %274 = vmatpush1.xpose.msra.mxu0 0.0
        %275 = vmatprep.subr.mxu0 0.0
        %276 = vmatpush1.xpose.msra.mxu0 0.0
        %277 = vmatprep.subr.mxu0 0.0
        %278 = vmatpush1.xpose.msra.mxu0 0.0
        %279 = vmatprep.subr.mxu0 0.0
        %280 = vmatpush1.xpose.msra.mxu0 0.0
        %281 = vmatprep.subr.mxu0 0.0
        %282 = vmatpush1.xpose.msra.mxu0 0.0
        %283 = vmatprep.subr.mxu0 0.0
        %284 = vmatpush1.xpose.msra.mxu0 0.0
        %285 = vmatprep.subr.mxu0 0.0
        %286 = vmatpush1.xpose.msra.mxu0 0.0
        %287 = vmatprep.subr.mxu0 0.0
        %288 = vmatpush1.xpose.msra.mxu0 0.0
        %289 = vmatprep.subr.mxu0 0.0
        %290 = vmatpush1.xpose.msra.mxu0 0.0
        %291 = vmatprep.subr.mxu0 0.0
        %292 = vmatpush1.xpose.msra.mxu0 0.0
        %293 = vmatprep.subr.mxu0 0.0
        %294 = vmatpush1.xpose.msra.mxu0 0.0
        %295 = vmatprep.subr.mxu0 0.0
        %296 = vmatpush1.xpose.msra.mxu0 0.0
        %297 = vmatprep.subr.mxu0 0.0
        %298 = vmatpush1.xpose.msra.mxu0 0.0
        %299 = vmatprep.subr.mxu0 0.0
        %300 = vmatpush1.xpose.msra.mxu0 0.0
        %301 = vmatprep.subr.mxu0 0.0
        %302 = vmatpush1.xpose.msra.mxu0 0.0
        %303 = vmatprep.subr.mxu0 0.0
        %304 = vmatpush1.xpose.msra.mxu0 0.0
        %305 = vmatprep.subr.mxu0 0.0
        %306 = vmatpush1.xpose.msra.mxu0 0.0
        %307 = vmatprep.subr.mxu0 0.0
        %308 = vmatpush1.xpose.msra.mxu0 0.0
        %309 = vmatprep.subr.mxu0 0.0
        %310 = vmatpush1.xpose.msra.mxu0 0.0
        %311 = vmatprep.mubr.f32.mxu0 0.0
        %312 = vmatmul.mubr.f32.gmra.mrb[0].mxu0 %v242
        %v313 = vpop.f32.mrb[0].mxu0
        %v314 = vadd.f32 0.0, %v313
        %v315 = vpop.f32.mrb[0].mxu0
        %316 = vdwg.mxu0
        %v318 = vsel %vm240, %v225, 0
        %v321 = vsel %vm240, %v233, 0
        %323 = vmatprep.subr.mxu0 0.0
        %324 = vmatpush1.xpose.msra.mxu0 %v321
        %325 = vmatprep.subr.mxu0 0.0
        %326 = vmatpush1.xpose.msra.mxu0 0.0
        %327 = vmatprep.subr.mxu0 0.0
        %328 = vmatpush1.xpose.msra.mxu0 0.0
        %329 = vmatprep.subr.mxu0 0.0
        %330 = vmatpush1.xpose.msra.mxu0 0.0
        %331 = vmatprep.subr.mxu0 0.0
        %332 = vmatpush1.xpose.msra.mxu0 0.0
        %333 = vmatprep.subr.mxu0 0.0
        %334 = vmatpush1.xpose.msra.mxu0 0.0
        %335 = vmatprep.subr.mxu0 0.0
        %336 = vmatpush1.xpose.msra.mxu0 0.0
        %337 = vmatprep.subr.mxu0 0.0
        %338 = vmatpush1.xpose.msra.mxu0 0.0
        %339 = vmatprep.subr.mxu0 0.0
        %340 = vmatpush1.xpose.msra.mxu0 0.0
        %341 = vmatprep.subr.mxu0 0.0
        %342 = vmatpush1.xpose.msra.mxu0 0.0
        %343 = vmatprep.subr.mxu0 0.0
        %344 = vmatpush1.xpose.msra.mxu0 0.0
        %345 = vmatprep.subr.mxu0 0.0
        %346 = vmatpush1.xpose.msra.mxu0 0.0
        %347 = vmatprep.subr.mxu0 0.0
        %348 = vmatpush1.xpose.msra.mxu0 0.0
        %349 = vmatprep.subr.mxu0 0.0
        %350 = vmatpush1.xpose.msra.mxu0 0.0
        %351 = vmatprep.subr.mxu0 0.0
        %352 = vmatpush1.xpose.msra.mxu0 0.0
        %353 = vmatprep.subr.mxu0 0.0
        %354 = vmatpush1.xpose.msra.mxu0 0.0
        %355 = vmatprep.subr.mxu0 0.0
        %356 = vmatpush1.xpose.msra.mxu0 0.0
        %357 = vmatprep.subr.mxu0 0.0
        %358 = vmatpush1.xpose.msra.mxu0 0.0
        %359 = vmatprep.subr.mxu0 0.0
        %360 = vmatpush1.xpose.msra.mxu0 0.0
        %361 = vmatprep.subr.mxu0 0.0
        %362 = vmatpush1.xpose.msra.mxu0 0.0
        %363 = vmatprep.subr.mxu0 0.0
        %364 = vmatpush1.xpose.msra.mxu0 0.0
        %365 = vmatprep.subr.mxu0 0.0
        %366 = vmatpush1.xpose.msra.mxu0 0.0
        %367 = vmatprep.subr.mxu0 0.0
        %368 = vmatpush1.xpose.msra.mxu0 0.0
        %369 = vmatprep.subr.mxu0 0.0
        %370 = vmatpush1.xpose.msra.mxu0 0.0
        %371 = vmatprep.subr.mxu0 0.0
        %372 = vmatpush1.xpose.msra.mxu0 0.0
        %373 = vmatprep.subr.mxu0 0.0
        %374 = vmatpush1.xpose.msra.mxu0 0.0
        %375 = vmatprep.subr.mxu0 0.0
        %376 = vmatpush1.xpose.msra.mxu0 0.0
        %377 = vmatprep.subr.mxu0 0.0
        %378 = vmatpush1.xpose.msra.mxu0 0.0
        %379 = vmatprep.subr.mxu0 0.0
        %380 = vmatpush1.xpose.msra.mxu0 0.0
        %381 = vmatprep.subr.mxu0 0.0
        %382 = vmatpush1.xpose.msra.mxu0 0.0
        %383 = vmatprep.subr.mxu0 0.0
        %384 = vmatpush1.xpose.msra.mxu0 0.0
        %385 = vmatprep.subr.mxu0 0.0
        %386 = vmatpush1.xpose.msra.mxu0 0.0
        %387 = vmatprep.mubr.f32.mxu0 0.0
        %388 = vmatmul.mubr.f32.gmra.mrb[0].mxu0 %v318
        %v389 = vpop.f32.mrb[0].mxu0
        %v390 = vadd.f32 0.0, %v389
        %v391 = vpop.f32.mrb[0].mxu0
        %392 = vdwg.mxu0
        %v394 = vsel %vm240, %v226, 0
        %v397 = vsel %vm240, %v234, 0
        %399 = vmatprep.subr.mxu0 0.0
        %400 = vmatpush1.xpose.msra.mxu0 %v397
        %401 = vmatprep.subr.mxu0 0.0
        %402 = vmatpush1.xpose.msra.mxu0 0.0
        %403 = vmatprep.subr.mxu0 0.0
        %404 = vmatpush1.xpose.msra.mxu0 0.0
        %405 = vmatprep.subr.mxu0 0.0
        %406 = vmatpush1.xpose.msra.mxu0 0.0
        %407 = vmatprep.subr.mxu0 0.0
        %408 = vmatpush1.xpose.msra.mxu0 0.0
        %409 = vmatprep.subr.mxu0 0.0
        %410 = vmatpush1.xpose.msra.mxu0 0.0
        %411 = vmatprep.subr.mxu0 0.0
        %412 = vmatpush1.xpose.msra.mxu0 0.0
        %413 = vmatprep.subr.mxu0 0.0
        %414 = vmatpush1.xpose.msra.mxu0 0.0
        %415 = vmatprep.subr.mxu0 0.0
        %416 = vmatpush1.xpose.msra.mxu0 0.0
        %417 = vmatprep.subr.mxu0 0.0
        %418 = vmatpush1.xpose.msra.mxu0 0.0
        %419 = vmatprep.subr.mxu0 0.0
        %420 = vmatpush1.xpose.msra.mxu0 0.0
        %421 = vmatprep.subr.mxu0 0.0
        %422 = vmatpush1.xpose.msra.mxu0 0.0
        %423 = vmatprep.subr.mxu0 0.0
        %424 = vmatpush1.xpose.msra.mxu0 0.0
        %425 = vmatprep.subr.mxu0 0.0
        %426 = vmatpush1.xpose.msra.mxu0 0.0
        %427 = vmatprep.subr.mxu0 0.0
        %428 = vmatpush1.xpose.msra.mxu0 0.0
        %429 = vmatprep.subr.mxu0 0.0
        %430 = vmatpush1.xpose.msra.mxu0 0.0
        %431 = vmatprep.subr.mxu0 0.0
        %432 = vmatpush1.xpose.msra.mxu0 0.0
        %433 = vmatprep.subr.mxu0 0.0
        %434 = vmatpush1.xpose.msra.mxu0 0.0
        %435 = vmatprep.subr.mxu0 0.0
        %436 = vmatpush1.xpose.msra.mxu0 0.0
        %437 = vmatprep.subr.mxu0 0.0
        %438 = vmatpush1.xpose.msra.mxu0 0.0
        %439 = vmatprep.subr.mxu0 0.0
        %440 = vmatpush1.xpose.msra.mxu0 0.0
        %441 = vmatprep.subr.mxu0 0.0
        %442 = vmatpush1.xpose.msra.mxu0 0.0
        %443 = vmatprep.subr.mxu0 0.0
        %444 = vmatpush1.xpose.msra.mxu0 0.0
        %445 = vmatprep.subr.mxu0 0.0
        %446 = vmatpush1.xpose.msra.mxu0 0.0
        %447 = vmatprep.subr.mxu0 0.0
        %448 = vmatpush1.xpose.msra.mxu0 0.0
        %449 = vmatprep.subr.mxu0 0.0
        %450 = vmatpush1.xpose.msra.mxu0 0.0
        %451 = vmatprep.subr.mxu0 0.0
        %452 = vmatpush1.xpose.msra.mxu0 0.0
        %453 = vmatprep.subr.mxu0 0.0
        %454 = vmatpush1.xpose.msra.mxu0 0.0
        %455 = vmatprep.subr.mxu0 0.0
        %456 = vmatpush1.xpose.msra.mxu0 0.0
        %457 = vmatprep.subr.mxu0 0.0
        %458 = vmatpush1.xpose.msra.mxu0 0.0
        %459 = vmatprep.subr.mxu0 0.0
        %460 = vmatpush1.xpose.msra.mxu0 0.0
        %461 = vmatprep.subr.mxu0 0.0
        %462 = vmatpush1.xpose.msra.mxu0 0.0
        %463 = vmatprep.mubr.f32.mxu0 0.0
        %464 = vmatmul.mubr.f32.gmra.mrb[0].mxu0 %v394
        %v465 = vpop.f32.mrb[0].mxu0
        %v466 = vadd.f32 0.0, %v465
        %v467 = vpop.f32.mrb[0].mxu0
        %468 = vdwg.mxu0
        %v470 = vsel %vm240, %v227, 0
        %v473 = vsel %vm240, %v235, 0
        %475 = vmatprep.subr.mxu0 0.0
        %476 = vmatpush1.xpose.msra.mxu0 %v473
        %477 = vmatprep.subr.mxu0 0.0
        %478 = vmatpush1.xpose.msra.mxu0 0.0
        %479 = vmatprep.subr.mxu0 0.0
        %480 = vmatpush1.xpose.msra.mxu0 0.0
        %481 = vmatprep.subr.mxu0 0.0
        %482 = vmatpush1.xpose.msra.mxu0 0.0
        %483 = vmatprep.subr.mxu0 0.0
        %484 = vmatpush1.xpose.msra.mxu0 0.0
        %485 = vmatprep.subr.mxu0 0.0
        %486 = vmatpush1.xpose.msra.mxu0 0.0
        %487 = vmatprep.subr.mxu0 0.0
        %488 = vmatpush1.xpose.msra.mxu0 0.0
        %489 = vmatprep.subr.mxu0 0.0
        %490 = vmatpush1.xpose.msra.mxu0 0.0
        %491 = vmatprep.subr.mxu0 0.0
        %492 = vmatpush1.xpose.msra.mxu0 0.0
        %493 = vmatprep.subr.mxu0 0.0
        %494 = vmatpush1.xpose.msra.mxu0 0.0
        %495 = vmatprep.subr.mxu0 0.0
        %496 = vmatpush1.xpose.msra.mxu0 0.0
        %497 = vmatprep.subr.mxu0 0.0
        %498 = vmatpush1.xpose.msra.mxu0 0.0
        %499 = vmatprep.subr.mxu0 0.0
        %500 = vmatpush1.xpose.msra.mxu0 0.0
        %501 = vmatprep.subr.mxu0 0.0
        %502 = vmatpush1.xpose.msra.mxu0 0.0
        %503 = vmatprep.subr.mxu0 0.0
        %504 = vmatpush1.xpose.msra.mxu0 0.0
        %505 = vmatprep.subr.mxu0 0.0
        %506 = vmatpush1.xpose.msra.mxu0 0.0
        %507 = vmatprep.subr.mxu0 0.0
        %508 = vmatpush1.xpose.msra.mxu0 0.0
        %509 = vmatprep.subr.mxu0 0.0
        %510 = vmatpush1.xpose.msra.mxu0 0.0
        %511 = vmatprep.subr.mxu0 0.0
        %512 = vmatpush1.xpose.msra.mxu0 0.0
        %513 = vmatprep.subr.mxu0 0.0
        %514 = vmatpush1.xpose.msra.mxu0 0.0
        %515 = vmatprep.subr.mxu0 0.0
        %516 = vmatpush1.xpose.msra.mxu0 0.0
        %517 = vmatprep.subr.mxu0 0.0
        %518 = vmatpush1.xpose.msra.mxu0 0.0
        %519 = vmatprep.subr.mxu0 0.0
        %520 = vmatpush1.xpose.msra.mxu0 0.0
        %521 = vmatprep.subr.mxu0 0.0
        %522 = vmatpush1.xpose.msra.mxu0 0.0
        %523 = vmatprep.subr.mxu0 0.0
        %524 = vmatpush1.xpose.msra.mxu0 0.0
        %525 = vmatprep.subr.mxu0 0.0
        %526 = vmatpush1.xpose.msra.mxu0 0.0
        %527 = vmatprep.subr.mxu0 0.0
        %528 = vmatpush1.xpose.msra.mxu0 0.0
        %529 = vmatprep.subr.mxu0 0.0
        %530 = vmatpush1.xpose.msra.mxu0 0.0
        %531 = vmatprep.subr.mxu0 0.0
        %532 = vmatpush1.xpose.msra.mxu0 0.0
        %533 = vmatprep.subr.mxu0 0.0
        %534 = vmatpush1.xpose.msra.mxu0 0.0
        %535 = vmatprep.subr.mxu0 0.0
        %536 = vmatpush1.xpose.msra.mxu0 0.0
        %537 = vmatprep.subr.mxu0 0.0
        %538 = vmatpush1.xpose.msra.mxu0 0.0
        %539 = vmatprep.mubr.f32.mxu0 0.0
        %540 = vmatmul.mubr.f32.gmra.mrb[0].mxu0 %v470
        %v541 = vpop.f32.mrb[0].mxu0
        %v542 = vadd.f32 0.0, %v541
        %v543 = vpop.f32.mrb[0].mxu0
        %544 = vdwg.mxu0
        %v546 = vsel %vm240, %v228, 0
        %v549 = vsel %vm240, %v236, 0
        %551 = vmatprep.subr.mxu0 0.0
        %552 = vmatpush1.xpose.msra.mxu0 %v549
        %553 = vmatprep.subr.mxu0 0.0
        %554 = vmatpush1.xpose.msra.mxu0 0.0
        %555 = vmatprep.subr.mxu0 0.0
        %556 = vmatpush1.xpose.msra.mxu0 0.0
        %557 = vmatprep.subr.mxu0 0.0
        %558 = vmatpush1.xpose.msra.mxu0 0.0
        %559 = vmatprep.subr.mxu0 0.0
        %560 = vmatpush1.xpose.msra.mxu0 0.0
        %561 = vmatprep.subr.mxu0 0.0
        %562 = vmatpush1.xpose.msra.mxu0 0.0
        %563 = vmatprep.subr.mxu0 0.0
        %564 = vmatpush1.xpose.msra.mxu0 0.0
        %565 = vmatprep.subr.mxu0 0.0
        %566 = vmatpush1.xpose.msra.mxu0 0.0
        %567 = vmatprep.subr.mxu0 0.0
        %568 = vmatpush1.xpose.msra.mxu0 0.0
        %569 = vmatprep.subr.mxu0 0.0
        %570 = vmatpush1.xpose.msra.mxu0 0.0
        %571 = vmatprep.subr.mxu0 0.0
        %572 = vmatpush1.xpose.msra.mxu0 0.0
        %573 = vmatprep.subr.mxu0 0.0
        %574 = vmatpush1.xpose.msra.mxu0 0.0
        %575 = vmatprep.subr.mxu0 0.0
        %576 = vmatpush1.xpose.msra.mxu0 0.0
        %577 = vmatprep.subr.mxu0 0.0
        %578 = vmatpush1.xpose.msra.mxu0 0.0
        %579 = vmatprep.subr.mxu0 0.0
        %580 = vmatpush1.xpose.msra.mxu0 0.0
        %581 = vmatprep.subr.mxu0 0.0
        %582 = vmatpush1.xpose.msra.mxu0 0.0
        %583 = vmatprep.subr.mxu0 0.0
        %584 = vmatpush1.xpose.msra.mxu0 0.0
        %585 = vmatprep.subr.mxu0 0.0
        %586 = vmatpush1.xpose.msra.mxu0 0.0
        %587 = vmatprep.subr.mxu0 0.0
        %588 = vmatpush1.xpose.msra.mxu0 0.0
        %589 = vmatprep.subr.mxu0 0.0
        %590 = vmatpush1.xpose.msra.mxu0 0.0
        %591 = vmatprep.subr.mxu0 0.0
        %592 = vmatpush1.xpose.msra.mxu0 0.0
        %593 = vmatprep.subr.mxu0 0.0
        %594 = vmatpush1.xpose.msra.mxu0 0.0
        %595 = vmatprep.subr.mxu0 0.0
        %596 = vmatpush1.xpose.msra.mxu0 0.0
        %597 = vmatprep.subr.mxu0 0.0
        %598 = vmatpush1.xpose.msra.mxu0 0.0
        %599 = vmatprep.subr.mxu0 0.0
        %600 = vmatpush1.xpose.msra.mxu0 0.0
        %601 = vmatprep.subr.mxu0 0.0
        %602 = vmatpush1.xpose.msra.mxu0 0.0
        %603 = vmatprep.subr.mxu0 0.0
        %604 = vmatpush1.xpose.msra.mxu0 0.0
        %605 = vmatprep.subr.mxu0 0.0
        %606 = vmatpush1.xpose.msra.mxu0 0.0
        %607 = vmatprep.subr.mxu0 0.0
        %608 = vmatpush1.xpose.msra.mxu0 0.0
        %609 = vmatprep.subr.mxu0 0.0
        %610 = vmatpush1.xpose.msra.mxu0 0.0
        %611 = vmatprep.subr.mxu0 0.0
        %612 = vmatpush1.xpose.msra.mxu0 0.0
        %613 = vmatprep.subr.mxu0 0.0
        %614 = vmatpush1.xpose.msra.mxu0 0.0
        %615 = vmatprep.mubr.f32.mxu0 0.0
        %616 = vmatmul.mubr.f32.gmra.mrb[0].mxu0 %v546
        %v617 = vpop.f32.mrb[0].mxu0
        %v618 = vadd.f32 0.0, %v617
        %v619 = vpop.f32.mrb[0].mxu0
        %620 = vdwg.mxu0
        %v622 = vsel %vm240, %v229, 0
        %v625 = vsel %vm240, %v237, 0
        %627 = vmatprep.subr.mxu0 0.0
        %628 = vmatpush1.xpose.msra.mxu0 %v625
        %629 = vmatprep.subr.mxu0 0.0
        %630 = vmatpush1.xpose.msra.mxu0 0.0
        %631 = vmatprep.subr.mxu0 0.0
        %632 = vmatpush1.xpose.msra.mxu0 0.0
        %633 = vmatprep.subr.mxu0 0.0
        %634 = vmatpush1.xpose.msra.mxu0 0.0
        %635 = vmatprep.subr.mxu0 0.0
        %636 = vmatpush1.xpose.msra.mxu0 0.0
        %637 = vmatprep.subr.mxu0 0.0
        %638 = vmatpush1.xpose.msra.mxu0 0.0
        %639 = vmatprep.subr.mxu0 0.0
        %640 = vmatpush1.xpose.msra.mxu0 0.0
        %641 = vmatprep.subr.mxu0 0.0
        %642 = vmatpush1.xpose.msra.mxu0 0.0
        %643 = vmatprep.subr.mxu0 0.0
        %644 = vmatpush1.xpose.msra.mxu0 0.0
        %645 = vmatprep.subr.mxu0 0.0
        %646 = vmatpush1.xpose.msra.mxu0 0.0
        %647 = vmatprep.subr.mxu0 0.0
        %648 = vmatpush1.xpose.msra.mxu0 0.0
        %649 = vmatprep.subr.mxu0 0.0
        %650 = vmatpush1.xpose.msra.mxu0 0.0
        %651 = vmatprep.subr.mxu0 0.0
        %652 = vmatpush1.xpose.msra.mxu0 0.0
        %653 = vmatprep.subr.mxu0 0.0
        %654 = vmatpush1.xpose.msra.mxu0 0.0
        %655 = vmatprep.subr.mxu0 0.0
        %656 = vmatpush1.xpose.msra.mxu0 0.0
        %657 = vmatprep.subr.mxu0 0.0
        %658 = vmatpush1.xpose.msra.mxu0 0.0
        %659 = vmatprep.subr.mxu0 0.0
        %660 = vmatpush1.xpose.msra.mxu0 0.0
        %661 = vmatprep.subr.mxu0 0.0
        %662 = vmatpush1.xpose.msra.mxu0 0.0
        %663 = vmatprep.subr.mxu0 0.0
        %664 = vmatpush1.xpose.msra.mxu0 0.0
        %665 = vmatprep.subr.mxu0 0.0
        %666 = vmatpush1.xpose.msra.mxu0 0.0
        %667 = vmatprep.subr.mxu0 0.0
        %668 = vmatpush1.xpose.msra.mxu0 0.0
        %669 = vmatprep.subr.mxu0 0.0
        %670 = vmatpush1.xpose.msra.mxu0 0.0
        %671 = vmatprep.subr.mxu0 0.0
        %672 = vmatpush1.xpose.msra.mxu0 0.0
        %673 = vmatprep.subr.mxu0 0.0
        %674 = vmatpush1.xpose.msra.mxu0 0.0
        %675 = vmatprep.subr.mxu0 0.0
        %676 = vmatpush1.xpose.msra.mxu0 0.0
        %677 = vmatprep.subr.mxu0 0.0
        %678 = vmatpush1.xpose.msra.mxu0 0.0
        %679 = vmatprep.subr.mxu0 0.0
        %680 = vmatpush1.xpose.msra.mxu0 0.0
        %681 = vmatprep.subr.mxu0 0.0
        %682 = vmatpush1.xpose.msra.mxu0 0.0
        %683 = vmatprep.subr.mxu0 0.0
        %684 = vmatpush1.xpose.msra.mxu0 0.0
        %685 = vmatprep.subr.mxu0 0.0
        %686 = vmatpush1.xpose.msra.mxu0 0.0
        %687 = vmatprep.subr.mxu0 0.0
        %688 = vmatpush1.xpose.msra.mxu0 0.0
        %689 = vmatprep.subr.mxu0 0.0
        %690 = vmatpush1.xpose.msra.mxu0 0.0
        %691 = vmatprep.mubr.f32.mxu0 0.0
        %692 = vmatmul.mubr.f32.gmra.mrb[0].mxu0 %v622
        %v693 = vpop.f32.mrb[0].mxu0
        %v694 = vadd.f32 0.0, %v693
        %v695 = vpop.f32.mrb[0].mxu0
        %696 = vdwg.mxu0
        %v698 = vsel %vm240, %v230, 0
        %v701 = vsel %vm240, %v238, 0
        %703 = vmatprep.subr.mxu0 0.0
        %704 = vmatpush1.xpose.msra.mxu0 %v701
        %705 = vmatprep.subr.mxu0 0.0
        %706 = vmatpush1.xpose.msra.mxu0 0.0
        %707 = vmatprep.subr.mxu0 0.0
        %708 = vmatpush1.xpose.msra.mxu0 0.0
        %709 = vmatprep.subr.mxu0 0.0
        %710 = vmatpush1.xpose.msra.mxu0 0.0
        %711 = vmatprep.subr.mxu0 0.0
        %712 = vmatpush1.xpose.msra.mxu0 0.0
        %713 = vmatprep.subr.mxu0 0.0
        %714 = vmatpush1.xpose.msra.mxu0 0.0
        %715 = vmatprep.subr.mxu0 0.0
        %716 = vmatpush1.xpose.msra.mxu0 0.0
        %717 = vmatprep.subr.mxu0 0.0
        %718 = vmatpush1.xpose.msra.mxu0 0.0
        %719 = vmatprep.subr.mxu0 0.0
        %720 = vmatpush1.xpose.msra.mxu0 0.0
        %721 = vmatprep.subr.mxu0 0.0
        %722 = vmatpush1.xpose.msra.mxu0 0.0
        %723 = vmatprep.subr.mxu0 0.0
        %724 = vmatpush1.xpose.msra.mxu0 0.0
        %725 = vmatprep.subr.mxu0 0.0
        %726 = vmatpush1.xpose.msra.mxu0 0.0
        %727 = vmatprep.subr.mxu0 0.0
        %728 = vmatpush1.xpose.msra.mxu0 0.0
        %729 = vmatprep.subr.mxu0 0.0
        %730 = vmatpush1.xpose.msra.mxu0 0.0
        %731 = vmatprep.subr.mxu0 0.0
        %732 = vmatpush1.xpose.msra.mxu0 0.0
        %733 = vmatprep.subr.mxu0 0.0
        %734 = vmatpush1.xpose.msra.mxu0 0.0
        %735 = vmatprep.subr.mxu0 0.0
        %736 = vmatpush1.xpose.msra.mxu0 0.0
        %737 = vmatprep.subr.mxu0 0.0
        %738 = vmatpush1.xpose.msra.mxu0 0.0
        %739 = vmatprep.subr.mxu0 0.0
        %740 = vmatpush1.xpose.msra.mxu0 0.0
        %741 = vmatprep.subr.mxu0 0.0
        %742 = vmatpush1.xpose.msra.mxu0 0.0
        %743 = vmatprep.subr.mxu0 0.0
        %744 = vmatpush1.xpose.msra.mxu0 0.0
        %745 = vmatprep.subr.mxu0 0.0
        %746 = vmatpush1.xpose.msra.mxu0 0.0
        %747 = vmatprep.subr.mxu0 0.0
        %748 = vmatpush1.xpose.msra.mxu0 0.0
        %749 = vmatprep.subr.mxu0 0.0
        %750 = vmatpush1.xpose.msra.mxu0 0.0
        %751 = vmatprep.subr.mxu0 0.0
        %752 = vmatpush1.xpose.msra.mxu0 0.0
        %753 = vmatprep.subr.mxu0 0.0
        %754 = vmatpush1.xpose.msra.mxu0 0.0
        %755 = vmatprep.subr.mxu0 0.0
        %756 = vmatpush1.xpose.msra.mxu0 0.0
        %757 = vmatprep.subr.mxu0 0.0
        %758 = vmatpush1.xpose.msra.mxu0 0.0
        %759 = vmatprep.subr.mxu0 0.0
        %760 = vmatpush1.xpose.msra.mxu0 0.0
        %761 = vmatprep.subr.mxu0 0.0
        %762 = vmatpush1.xpose.msra.mxu0 0.0
        %763 = vmatprep.subr.mxu0 0.0
        %764 = vmatpush1.xpose.msra.mxu0 0.0
        %765 = vmatprep.subr.mxu0 0.0
        %766 = vmatpush1.xpose.msra.mxu0 0.0
        %767 = vmatprep.mubr.f32.mxu0 0.0
        %768 = vmatmul.mubr.f32.gmra.mrb[0].mxu0 %v698
        %v769 = vpop.f32.mrb[0].mxu0
        %v770 = vadd.f32 0.0, %v769
        %v771 = vpop.f32.mrb[0].mxu0
        %772 = vdwg.mxu0
        %v774 = vsel %vm240, %v231, 0
        %v777 = vsel %vm240, %v239, 0
        %779 = vmatprep.subr.mxu0 0.0
        %780 = vmatpush1.xpose.msra.mxu0 %v777
        %781 = vmatprep.subr.mxu0 0.0
        %782 = vmatpush1.xpose.msra.mxu0 0.0
        %783 = vmatprep.subr.mxu0 0.0
        %784 = vmatpush1.xpose.msra.mxu0 0.0
        %785 = vmatprep.subr.mxu0 0.0
        %786 = vmatpush1.xpose.msra.mxu0 0.0
        %787 = vmatprep.subr.mxu0 0.0
        %788 = vmatpush1.xpose.msra.mxu0 0.0
        %789 = vmatprep.subr.mxu0 0.0
        %790 = vmatpush1.xpose.msra.mxu0 0.0
        %791 = vmatprep.subr.mxu0 0.0
        %792 = vmatpush1.xpose.msra.mxu0 0.0
        %793 = vmatprep.subr.mxu0 0.0
        %794 = vmatpush1.xpose.msra.mxu0 0.0
        %795 = vmatprep.subr.mxu0 0.0
        %796 = vmatpush1.xpose.msra.mxu0 0.0
        %797 = vmatprep.subr.mxu0 0.0
        %798 = vmatpush1.xpose.msra.mxu0 0.0
        %799 = vmatprep.subr.mxu0 0.0
        %800 = vmatpush1.xpose.msra.mxu0 0.0
        %801 = vmatprep.subr.mxu0 0.0
        %802 = vmatpush1.xpose.msra.mxu0 0.0
        %803 = vmatprep.subr.mxu0 0.0
        %804 = vmatpush1.xpose.msra.mxu0 0.0
        %805 = vmatprep.subr.mxu0 0.0
        %806 = vmatpush1.xpose.msra.mxu0 0.0
        %807 = vmatprep.subr.mxu0 0.0
        %808 = vmatpush1.xpose.msra.mxu0 0.0
        %809 = vmatprep.subr.mxu0 0.0
        %810 = vmatpush1.xpose.msra.mxu0 0.0
        %811 = vmatprep.subr.mxu0 0.0
        %812 = vmatpush1.xpose.msra.mxu0 0.0
        %813 = vmatprep.subr.mxu0 0.0
        %814 = vmatpush1.xpose.msra.mxu0 0.0
        %815 = vmatprep.subr.mxu0 0.0
        %816 = vmatpush1.xpose.msra.mxu0 0.0
        %817 = vmatprep.subr.mxu0 0.0
        %818 = vmatpush1.xpose.msra.mxu0 0.0
        %819 = vmatprep.subr.mxu0 0.0
        %820 = vmatpush1.xpose.msra.mxu0 0.0
        %821 = vmatprep.subr.mxu0 0.0
        %822 = vmatpush1.xpose.msra.mxu0 0.0
        %823 = vmatprep.subr.mxu0 0.0
        %824 = vmatpush1.xpose.msra.mxu0 0.0
        %825 = vmatprep.subr.mxu0 0.0
        %826 = vmatpush1.xpose.msra.mxu0 0.0
        %827 = vmatprep.subr.mxu0 0.0
        %828 = vmatpush1.xpose.msra.mxu0 0.0
        %829 = vmatprep.subr.mxu0 0.0
        %830 = vmatpush1.xpose.msra.mxu0 0.0
        %831 = vmatprep.subr.mxu0 0.0
        %832 = vmatpush1.xpose.msra.mxu0 0.0
        %833 = vmatprep.subr.mxu0 0.0
        %834 = vmatpush1.xpose.msra.mxu0 0.0
        %835 = vmatprep.subr.mxu0 0.0
        %836 = vmatpush1.xpose.msra.mxu0 0.0
        %837 = vmatprep.subr.mxu0 0.0
        %838 = vmatpush1.xpose.msra.mxu0 0.0
        %839 = vmatprep.subr.mxu0 0.0
        %840 = vmatpush1.xpose.msra.mxu0 0.0
        %841 = vmatprep.subr.mxu0 0.0
        %842 = vmatpush1.xpose.msra.mxu0 0.0
        %843 = vmatprep.mubr.f32.mxu0 0.0
        %844 = vmatmul.mubr.f32.gmra.mrb[0].mxu0 %v774
        %v845 = vpop.f32.mrb[0].mxu0
        %v846 = vadd.f32 0.0, %v845
        %v847 = vpop.f32.mrb[0].mxu0
        %848 = vdwg.mxu0
        %vm849 = vcmask 64512
        %v850 = vsel %vm849, %v314, -inf
        %851 = vmax.xlane.f32.xlu0 %v850
        %v852 = vpop.xlane.xlu0 %851
        %v853 = vsel %vm849, %v390, -inf
        %854 = vmax.xlane.f32.xlu0 %v853
        %v855 = vpop.xlane.xlu0 %854
        %v856 = vsel %vm849, %v466, -inf
        %857 = vmax.xlane.f32.xlu0 %v856
        %v858 = vpop.xlane.xlu0 %857
        %v859 = vsel %vm849, %v542, -inf
        %860 = vmax.xlane.f32.xlu0 %v859
        %v861 = vpop.xlane.xlu0 %860
        %v862 = vsel %vm849, %v618, -inf
        %863 = vmax.xlane.f32.xlu0 %v862
        %v864 = vpop.xlane.xlu0 %863
        %v865 = vsel %vm849, %v694, -inf
        %866 = vmax.xlane.f32.xlu0 %v865
        %v867 = vpop.xlane.xlu0 %866
        %v868 = vsel %vm849, %v770, -inf
        %869 = vmax.xlane.f32.xlu0 %v868
        %v870 = vpop.xlane.xlu0 %869
        %v871 = vsel %vm849, %v846, -inf
        %872 = vmax.xlane.f32.xlu0 %v871
        %v873 = vpop.xlane.xlu0 %872
        %v874 = vsub.f32 %v314, %v852
        %v875 = vsub.f32 %v390, %v855
        %v876 = vsub.f32 %v466, %v858
        %v877 = vsub.f32 %v542, %v861
        %v878 = vsub.f32 %v618, %v864
        %v879 = vsub.f32 %v694, %v867
        %v880 = vsub.f32 %v770, %v870
        %v881 = vsub.f32 %v846, %v873
        %v882 = vmul.f32 %v874, 1.442695
        %v883 = vpow.pop %v882
        %v884 = vmul.f32 %v875, 1.442695
        %v885 = vpow.pop %v884
        %v886 = vmul.f32 %v876, 1.442695
        %v887 = vpow.pop %v886
        %v888 = vmul.f32 %v877, 1.442695
        %v889 = vpow.pop %v888
        %v890 = vmul.f32 %v878, 1.442695
        %v891 = vpow.pop %v890
        %v892 = vmul.f32 %v879, 1.442695
        %v893 = vpow.pop %v892
        %v894 = vmul.f32 %v880, 1.442695
        %v895 = vpow.pop %v894
        %v896 = vmul.f32 %v881, 1.442695
        %v897 = vpow.pop %v896
        %v898 = vsel %vm849, %v883, 0.0
        %899 = vadd.xlane.f32.xlu0 %v898
        %v900 = vpop.xlane.xlu0 %899
        %v901 = vsel %vm849, %v885, 0.0
        %902 = vadd.xlane.f32.xlu0 %v901
        %v903 = vpop.xlane.xlu0 %902
        %v904 = vsel %vm849, %v887, 0.0
        %905 = vadd.xlane.f32.xlu0 %v904
        %v906 = vpop.xlane.xlu0 %905
        %v907 = vsel %vm849, %v889, 0.0
        %908 = vadd.xlane.f32.xlu0 %v907
        %v909 = vpop.xlane.xlu0 %908
        %v910 = vsel %vm849, %v891, 0.0
        %911 = vadd.xlane.f32.xlu0 %v910
        %v912 = vpop.xlane.xlu0 %911
        %v913 = vsel %vm849, %v893, 0.0
        %914 = vadd.xlane.f32.xlu0 %v913
        %v915 = vpop.xlane.xlu0 %914
        %v916 = vsel %vm849, %v895, 0.0
        %917 = vadd.xlane.f32.xlu0 %v916
        %v918 = vpop.xlane.xlu0 %917
        %v919 = vsel %vm849, %v897, 0.0
        %920 = vadd.xlane.f32.xlu0 %v919
        %v921 = vpop.xlane.xlu0 %920
        %v922 = vrcp.pop %v900
        %v923 = vrcp.pop %v903
        %v924 = vrcp.pop %v906
        %v925 = vrcp.pop %v909
        %v926 = vrcp.pop %v912
        %v927 = vrcp.pop %v915
        %v928 = vrcp.pop %v918
        %v929 = vrcp.pop %v921
        %v930 = vmul.f32 %v883, %v922
        %v931 = vmul.f32 %v885, %v923
        %v932 = vmul.f32 %v887, %v924
        %v933 = vmul.f32 %v889, %v925
        %v934 = vmul.f32 %v891, %v926
        %v935 = vmul.f32 %v893, %v927
        %v936 = vmul.f32 %v895, %v928
        %v937 = vmul.f32 %v897, %v929
        %v939 = vsel %vm849, %v930, 0
        %941 = vmatprep.subr.mxu0 0.0
        %942 = vmatpush1.msra.mxu0 %v232
        %943 = vmatprep.subr.mxu0 0.0
        %944 = vmatpush1.msra.mxu0 0.0
        %945 = vmatprep.subr.mxu0 0.0
        %946 = vmatpush1.msra.mxu0 0.0
        %947 = vmatprep.subr.mxu0 0.0
        %948 = vmatpush1.msra.mxu0 0.0
        %949 = vmatprep.subr.mxu0 0.0
        %950 = vmatpush1.msra.mxu0 0.0
        %951 = vmatprep.subr.mxu0 0.0
        %952 = vmatpush1.msra.mxu0 0.0
        %953 = vmatprep.subr.mxu0 0.0
        %954 = vmatpush1.msra.mxu0 0.0
        %955 = vmatprep.subr.mxu0 0.0
        %956 = vmatpush1.msra.mxu0 0.0
        %957 = vmatprep.subr.mxu0 0.0
        %958 = vmatpush1.msra.mxu0 0.0
        %959 = vmatprep.subr.mxu0 0.0
        %960 = vmatpush1.msra.mxu0 0.0
        %961 = vmatprep.subr.mxu0 0.0
        %962 = vmatpush1.msra.mxu0 0.0
        %963 = vmatprep.subr.mxu0 0.0
        %964 = vmatpush1.msra.mxu0 0.0
        %965 = vmatprep.subr.mxu0 0.0
        %966 = vmatpush1.msra.mxu0 0.0
        %967 = vmatprep.subr.mxu0 0.0
        %968 = vmatpush1.msra.mxu0 0.0
        %969 = vmatprep.subr.mxu0 0.0
        %970 = vmatpush1.msra.mxu0 0.0
        %971 = vmatprep.subr.mxu0 0.0
        %972 = vmatpush1.msra.mxu0 0.0
        %973 = vmatprep.subr.mxu0 0.0
        %974 = vmatpush1.msra.mxu0 0.0
        %975 = vmatprep.subr.mxu0 0.0
        %976 = vmatpush1.msra.mxu0 0.0
        %977 = vmatprep.subr.mxu0 0.0
        %978 = vmatpush1.msra.mxu0 0.0
        %979 = vmatprep.subr.mxu0 0.0
        %980 = vmatpush1.msra.mxu0 0.0
        %981 = vmatprep.subr.mxu0 0.0
        %982 = vmatpush1.msra.mxu0 0.0
        %983 = vmatprep.subr.mxu0 0.0
        %984 = vmatpush1.msra.mxu0 0.0
        %985 = vmatprep.subr.mxu0 0.0
        %986 = vmatpush1.msra.mxu0 0.0
        %987 = vmatprep.subr.mxu0 0.0
        %988 = vmatpush1.msra.mxu0 0.0
        %989 = vmatprep.subr.mxu0 0.0
        %990 = vmatpush1.msra.mxu0 0.0
        %991 = vmatprep.subr.mxu0 0.0
        %992 = vmatpush1.msra.mxu0 0.0
        %993 = vmatprep.subr.mxu0 0.0
        %994 = vmatpush1.msra.mxu0 0.0
        %995 = vmatprep.subr.mxu0 0.0
        %996 = vmatpush1.msra.mxu0 0.0
        %997 = vmatprep.subr.mxu0 0.0
        %998 = vmatpush1.msra.mxu0 0.0
        %999 = vmatprep.subr.mxu0 0.0
        %1000 = vmatpush1.msra.mxu0 0.0
        %1001 = vmatprep.subr.mxu0 0.0
        %1002 = vmatpush1.msra.mxu0 0.0
        %1003 = vmatprep.subr.mxu0 0.0
        %1004 = vmatpush1.msra.mxu0 0.0
        %1005 = vmatprep.mubr.f32.mxu0 0.0
        %1006 = vmatmul.mubr.f32.gmra.mrb[0].mxu0 %v939
        %v1007 = vpop.f32.mrb[0].mxu0
        %v1008 = vadd.f32 0.0, %v1007
        %v1009 = vpop.f32.mrb[0].mxu0
        %1010 = vdwg.mxu0
        %v1012 = vsel %vm849, %v931, 0
        %1014 = vmatprep.subr.mxu0 0.0
        %1015 = vmatpush1.msra.mxu0 %v233
        %1016 = vmatprep.subr.mxu0 0.0
        %1017 = vmatpush1.msra.mxu0 0.0
        %1018 = vmatprep.subr.mxu0 0.0
        %1019 = vmatpush1.msra.mxu0 0.0
        %1020 = vmatprep.subr.mxu0 0.0
        %1021 = vmatpush1.msra.mxu0 0.0
        %1022 = vmatprep.subr.mxu0 0.0
        %1023 = vmatpush1.msra.mxu0 0.0
        %1024 = vmatprep.subr.mxu0 0.0
        %1025 = vmatpush1.msra.mxu0 0.0
        %1026 = vmatprep.subr.mxu0 0.0
        %1027 = vmatpush1.msra.mxu0 0.0
        %1028 = vmatprep.subr.mxu0 0.0
        %1029 = vmatpush1.msra.mxu0 0.0
        %1030 = vmatprep.subr.mxu0 0.0
        %1031 = vmatpush1.msra.mxu0 0.0
        %1032 = vmatprep.subr.mxu0 0.0
        %1033 = vmatpush1.msra.mxu0 0.0
        %1034 = vmatprep.subr.mxu0 0.0
        %1035 = vmatpush1.msra.mxu0 0.0
        %1036 = vmatprep.subr.mxu0 0.0
        %1037 = vmatpush1.msra.mxu0 0.0
        %1038 = vmatprep.subr.mxu0 0.0
        %1039 = vmatpush1.msra.mxu0 0.0
        %1040 = vmatprep.subr.mxu0 0.0
        %1041 = vmatpush1.msra.mxu0 0.0
        %1042 = vmatprep.subr.mxu0 0.0
        %1043 = vmatpush1.msra.mxu0 0.0
        %1044 = vmatprep.subr.mxu0 0.0
        %1045 = vmatpush1.msra.mxu0 0.0
        %1046 = vmatprep.subr.mxu0 0.0
        %1047 = vmatpush1.msra.mxu0 0.0
        %1048 = vmatprep.subr.mxu0 0.0
        %1049 = vmatpush1.msra.mxu0 0.0
        %1050 = vmatprep.subr.mxu0 0.0
        %1051 = vmatpush1.msra.mxu0 0.0
        %1052 = vmatprep.subr.mxu0 0.0
        %1053 = vmatpush1.msra.mxu0 0.0
        %1054 = vmatprep.subr.mxu0 0.0
        %1055 = vmatpush1.msra.mxu0 0.0
        %1056 = vmatprep.subr.mxu0 0.0
        %1057 = vmatpush1.msra.mxu0 0.0
        %1058 = vmatprep.subr.mxu0 0.0
        %1059 = vmatpush1.msra.mxu0 0.0
        %1060 = vmatprep.subr.mxu0 0.0
        %1061 = vmatpush1.msra.mxu0 0.0
        %1062 = vmatprep.subr.mxu0 0.0
        %1063 = vmatpush1.msra.mxu0 0.0
        %1064 = vmatprep.subr.mxu0 0.0
        %1065 = vmatpush1.msra.mxu0 0.0
        %1066 = vmatprep.subr.mxu0 0.0
        %1067 = vmatpush1.msra.mxu0 0.0
        %1068 = vmatprep.subr.mxu0 0.0
        %1069 = vmatpush1.msra.mxu0 0.0
        %1070 = vmatprep.subr.mxu0 0.0
        %1071 = vmatpush1.msra.mxu0 0.0
        %1072 = vmatprep.subr.mxu0 0.0
        %1073 = vmatpush1.msra.mxu0 0.0
        %1074 = vmatprep.subr.mxu0 0.0
        %1075 = vmatpush1.msra.mxu0 0.0
        %1076 = vmatprep.subr.mxu0 0.0
        %1077 = vmatpush1.msra.mxu0 0.0
        %1078 = vmatprep.mubr.f32.mxu0 0.0
        %1079 = vmatmul.mubr.f32.gmra.mrb[0].mxu0 %v1012
        %v1080 = vpop.f32.mrb[0].mxu0
        %v1081 = vadd.f32 0.0, %v1080
        %v1082 = vpop.f32.mrb[0].mxu0
        %1083 = vdwg.mxu0
        %v1085 = vsel %vm849, %v932, 0
        %1087 = vmatprep.subr.mxu0 0.0
        %1088 = vmatpush1.msra.mxu0 %v234
        %1089 = vmatprep.subr.mxu0 0.0
        %1090 = vmatpush1.msra.mxu0 0.0
        %1091 = vmatprep.subr.mxu0 0.0
        %1092 = vmatpush1.msra.mxu0 0.0
        %1093 = vmatprep.subr.mxu0 0.0
        %1094 = vmatpush1.msra.mxu0 0.0
        %1095 = vmatprep.subr.mxu0 0.0
        %1096 = vmatpush1.msra.mxu0 0.0
        %1097 = vmatprep.subr.mxu0 0.0
        %1098 = vmatpush1.msra.mxu0 0.0
        %1099 = vmatprep.subr.mxu0 0.0
        %1100 = vmatpush1.msra.mxu0 0.0
        %1101 = vmatprep.subr.mxu0 0.0
        %1102 = vmatpush1.msra.mxu0 0.0
        %1103 = vmatprep.subr.mxu0 0.0
        %1104 = vmatpush1.msra.mxu0 0.0
        %1105 = vmatprep.subr.mxu0 0.0
        %1106 = vmatpush1.msra.mxu0 0.0
        %1107 = vmatprep.subr.mxu0 0.0
        %1108 = vmatpush1.msra.mxu0 0.0
        %1109 = vmatprep.subr.mxu0 0.0
        %1110 = vmatpush1.msra.mxu0 0.0
        %1111 = vmatprep.subr.mxu0 0.0
        %1112 = vmatpush1.msra.mxu0 0.0
        %1113 = vmatprep.subr.mxu0 0.0
        %1114 = vmatpush1.msra.mxu0 0.0
        %1115 = vmatprep.subr.mxu0 0.0
        %1116 = vmatpush1.msra.mxu0 0.0
        %1117 = vmatprep.subr.mxu0 0.0
        %1118 = vmatpush1.msra.mxu0 0.0
        %1119 = vmatprep.subr.mxu0 0.0
        %1120 = vmatpush1.msra.mxu0 0.0
        %1121 = vmatprep.subr.mxu0 0.0
        %1122 = vmatpush1.msra.mxu0 0.0
        %1123 = vmatprep.subr.mxu0 0.0
        %1124 = vmatpush1.msra.mxu0 0.0
        %1125 = vmatprep.subr.mxu0 0.0
        %1126 = vmatpush1.msra.mxu0 0.0
        %1127 = vmatprep.subr.mxu0 0.0
        %1128 = vmatpush1.msra.mxu0 0.0
        %1129 = vmatprep.subr.mxu0 0.0
        %1130 = vmatpush1.msra.mxu0 0.0
        %1131 = vmatprep.subr.mxu0 0.0
        %1132 = vmatpush1.msra.mxu0 0.0
        %1133 = vmatprep.subr.mxu0 0.0
        %1134 = vmatpush1.msra.mxu0 0.0
        %1135 = vmatprep.subr.mxu0 0.0
        %1136 = vmatpush1.msra.mxu0 0.0
        %1137 = vmatprep.subr.mxu0 0.0
        %1138 = vmatpush1.msra.mxu0 0.0
        %1139 = vmatprep.subr.mxu0 0.0
        %1140 = vmatpush1.msra.mxu0 0.0
        %1141 = vmatprep.subr.mxu0 0.0
        %1142 = vmatpush1.msra.mxu0 0.0
        %1143 = vmatprep.subr.mxu0 0.0
        %1144 = vmatpush1.msra.mxu0 0.0
        %1145 = vmatprep.subr.mxu0 0.0
        %1146 = vmatpush1.msra.mxu0 0.0
        %1147 = vmatprep.subr.mxu0 0.0
        %1148 = vmatpush1.msra.mxu0 0.0
        %1149 = vmatprep.subr.mxu0 0.0
        %1150 = vmatpush1.msra.mxu0 0.0
        %1151 = vmatprep.mubr.f32.mxu0 0.0
        %1152 = vmatmul.mubr.f32.gmra.mrb[0].mxu0 %v1085
        %v1153 = vpop.f32.mrb[0].mxu0
        %v1154 = vadd.f32 0.0, %v1153
        %v1155 = vpop.f32.mrb[0].mxu0
        %1156 = vdwg.mxu0
        %v1158 = vsel %vm849, %v933, 0
        %1160 = vmatprep.subr.mxu0 0.0
        %1161 = vmatpush1.msra.mxu0 %v235
        %1162 = vmatprep.subr.mxu0 0.0
        %1163 = vmatpush1.msra.mxu0 0.0
        %1164 = vmatprep.subr.mxu0 0.0
        %1165 = vmatpush1.msra.mxu0 0.0
        %1166 = vmatprep.subr.mxu0 0.0
        %1167 = vmatpush1.msra.mxu0 0.0
        %1168 = vmatprep.subr.mxu0 0.0
        %1169 = vmatpush1.msra.mxu0 0.0
        %1170 = vmatprep.subr.mxu0 0.0
        %1171 = vmatpush1.msra.mxu0 0.0
        %1172 = vmatprep.subr.mxu0 0.0
        %1173 = vmatpush1.msra.mxu0 0.0
        %1174 = vmatprep.subr.mxu0 0.0
        %1175 = vmatpush1.msra.mxu0 0.0
        %1176 = vmatprep.subr.mxu0 0.0
        %1177 = vmatpush1.msra.mxu0 0.0
        %1178 = vmatprep.subr.mxu0 0.0
        %1179 = vmatpush1.msra.mxu0 0.0
        %1180 = vmatprep.subr.mxu0 0.0
        %1181 = vmatpush1.msra.mxu0 0.0
        %1182 = vmatprep.subr.mxu0 0.0
        %1183 = vmatpush1.msra.mxu0 0.0
        %1184 = vmatprep.subr.mxu0 0.0
        %1185 = vmatpush1.msra.mxu0 0.0
        %1186 = vmatprep.subr.mxu0 0.0
        %1187 = vmatpush1.msra.mxu0 0.0
        %1188 = vmatprep.subr.mxu0 0.0
        %1189 = vmatpush1.msra.mxu0 0.0
        %1190 = vmatprep.subr.mxu0 0.0
        %1191 = vmatpush1.msra.mxu0 0.0
        %1192 = vmatprep.subr.mxu0 0.0
        %1193 = vmatpush1.msra.mxu0 0.0
        %1194 = vmatprep.subr.mxu0 0.0
        %1195 = vmatpush1.msra.mxu0 0.0
        %1196 = vmatprep.subr.mxu0 0.0
        %1197 = vmatpush1.msra.mxu0 0.0
        %1198 = vmatprep.subr.mxu0 0.0
        %1199 = vmatpush1.msra.mxu0 0.0
        %1200 = vmatprep.subr.mxu0 0.0
        %1201 = vmatpush1.msra.mxu0 0.0
        %1202 = vmatprep.subr.mxu0 0.0
        %1203 = vmatpush1.msra.mxu0 0.0
        %1204 = vmatprep.subr.mxu0 0.0
        %1205 = vmatpush1.msra.mxu0 0.0
        %1206 = vmatprep.subr.mxu0 0.0
        %1207 = vmatpush1.msra.mxu0 0.0
        %1208 = vmatprep.subr.mxu0 0.0
        %1209 = vmatpush1.msra.mxu0 0.0
        %1210 = vmatprep.subr.mxu0 0.0
        %1211 = vmatpush1.msra.mxu0 0.0
        %1212 = vmatprep.subr.mxu0 0.0
        %1213 = vmatpush1.msra.mxu0 0.0
        %1214 = vmatprep.subr.mxu0 0.0
        %1215 = vmatpush1.msra.mxu0 0.0
        %1216 = vmatprep.subr.mxu0 0.0
        %1217 = vmatpush1.msra.mxu0 0.0
        %1218 = vmatprep.subr.mxu0 0.0
        %1219 = vmatpush1.msra.mxu0 0.0
        %1220 = vmatprep.subr.mxu0 0.0
        %1221 = vmatpush1.msra.mxu0 0.0
        %1222 = vmatprep.subr.mxu0 0.0
        %1223 = vmatpush1.msra.mxu0 0.0
        %1224 = vmatprep.mubr.f32.mxu0 0.0
        %1225 = vmatmul.mubr.f32.gmra.mrb[0].mxu0 %v1158
        %v1226 = vpop.f32.mrb[0].mxu0
        %v1227 = vadd.f32 0.0, %v1226
        %v1228 = vpop.f32.mrb[0].mxu0
        %1229 = vdwg.mxu0
        %v1231 = vsel %vm849, %v934, 0
        %1233 = vmatprep.subr.mxu0 0.0
        %1234 = vmatpush1.msra.mxu0 %v236
        %1235 = vmatprep.subr.mxu0 0.0
        %1236 = vmatpush1.msra.mxu0 0.0
        %1237 = vmatprep.subr.mxu0 0.0
        %1238 = vmatpush1.msra.mxu0 0.0
        %1239 = vmatprep.subr.mxu0 0.0
        %1240 = vmatpush1.msra.mxu0 0.0
        %1241 = vmatprep.subr.mxu0 0.0
        %1242 = vmatpush1.msra.mxu0 0.0
        %1243 = vmatprep.subr.mxu0 0.0
        %1244 = vmatpush1.msra.mxu0 0.0
        %1245 = vmatprep.subr.mxu0 0.0
        %1246 = vmatpush1.msra.mxu0 0.0
        %1247 = vmatprep.subr.mxu0 0.0
        %1248 = vmatpush1.msra.mxu0 0.0
        %1249 = vmatprep.subr.mxu0 0.0
        %1250 = vmatpush1.msra.mxu0 0.0
        %1251 = vmatprep.subr.mxu0 0.0
        %1252 = vmatpush1.msra.mxu0 0.0
        %1253 = vmatprep.subr.mxu0 0.0
        %1254 = vmatpush1.msra.mxu0 0.0
        %1255 = vmatprep.subr.mxu0 0.0
        %1256 = vmatpush1.msra.mxu0 0.0
        %1257 = vmatprep.subr.mxu0 0.0
        %1258 = vmatpush1.msra.mxu0 0.0
        %1259 = vmatprep.subr.mxu0 0.0
        %1260 = vmatpush1.msra.mxu0 0.0
        %1261 = vmatprep.subr.mxu0 0.0
        %1262 = vmatpush1.msra.mxu0 0.0
        %1263 = vmatprep.subr.mxu0 0.0
        %1264 = vmatpush1.msra.mxu0 0.0
        %1265 = vmatprep.subr.mxu0 0.0
        %1266 = vmatpush1.msra.mxu0 0.0
        %1267 = vmatprep.subr.mxu0 0.0
        %1268 = vmatpush1.msra.mxu0 0.0
        %1269 = vmatprep.subr.mxu0 0.0
        %1270 = vmatpush1.msra.mxu0 0.0
        %1271 = vmatprep.subr.mxu0 0.0
        %1272 = vmatpush1.msra.mxu0 0.0
        %1273 = vmatprep.subr.mxu0 0.0
        %1274 = vmatpush1.msra.mxu0 0.0
        %1275 = vmatprep.subr.mxu0 0.0
        %1276 = vmatpush1.msra.mxu0 0.0
        %1277 = vmatprep.subr.mxu0 0.0
        %1278 = vmatpush1.msra.mxu0 0.0
        %1279 = vmatprep.subr.mxu0 0.0
        %1280 = vmatpush1.msra.mxu0 0.0
        %1281 = vmatprep.subr.mxu0 0.0
        %1282 = vmatpush1.msra.mxu0 0.0
        %1283 = vmatprep.subr.mxu0 0.0
        %1284 = vmatpush1.msra.mxu0 0.0
        %1285 = vmatprep.subr.mxu0 0.0
        %1286 = vmatpush1.msra.mxu0 0.0
        %1287 = vmatprep.subr.mxu0 0.0
        %1288 = vmatpush1.msra.mxu0 0.0
        %1289 = vmatprep.subr.mxu0 0.0
        %1290 = vmatpush1.msra.mxu0 0.0
        %1291 = vmatprep.subr.mxu0 0.0
        %1292 = vmatpush1.msra.mxu0 0.0
        %1293 = vmatprep.subr.mxu0 0.0
        %1294 = vmatpush1.msra.mxu0 0.0
        %1295 = vmatprep.subr.mxu0 0.0
        %1296 = vmatpush1.msra.mxu0 0.0
        %1297 = vmatprep.mubr.f32.mxu0 0.0
        %1298 = vmatmul.mubr.f32.gmra.mrb[0].mxu0 %v1231
        %v1299 = vpop.f32.mrb[0].mxu0
        %v1300 = vadd.f32 0.0, %v1299
        %v1301 = vpop.f32.mrb[0].mxu0
        %1302 = vdwg.mxu0
        %v1304 = vsel %vm849, %v935, 0
        %1306 = vmatprep.subr.mxu0 0.0
        %1307 = vmatpush1.msra.mxu0 %v237
        %1308 = vmatprep.subr.mxu0 0.0
        %1309 = vmatpush1.msra.mxu0 0.0
        %1310 = vmatprep.subr.mxu0 0.0
        %1311 = vmatpush1.msra.mxu0 0.0
        %1312 = vmatprep.subr.mxu0 0.0
        %1313 = vmatpush1.msra.mxu0 0.0
        %1314 = vmatprep.subr.mxu0 0.0
        %1315 = vmatpush1.msra.mxu0 0.0
        %1316 = vmatprep.subr.mxu0 0.0
        %1317 = vmatpush1.msra.mxu0 0.0
        %1318 = vmatprep.subr.mxu0 0.0
        %1319 = vmatpush1.msra.mxu0 0.0
        %1320 = vmatprep.subr.mxu0 0.0
        %1321 = vmatpush1.msra.mxu0 0.0
        %1322 = vmatprep.subr.mxu0 0.0
        %1323 = vmatpush1.msra.mxu0 0.0
        %1324 = vmatprep.subr.mxu0 0.0
        %1325 = vmatpush1.msra.mxu0 0.0
        %1326 = vmatprep.subr.mxu0 0.0
        %1327 = vmatpush1.msra.mxu0 0.0
        %1328 = vmatprep.subr.mxu0 0.0
        %1329 = vmatpush1.msra.mxu0 0.0
        %1330 = vmatprep.subr.mxu0 0.0
        %1331 = vmatpush1.msra.mxu0 0.0
        %1332 = vmatprep.subr.mxu0 0.0
        %1333 = vmatpush1.msra.mxu0 0.0
        %1334 = vmatprep.subr.mxu0 0.0
        %1335 = vmatpush1.msra.mxu0 0.0
        %1336 = vmatprep.subr.mxu0 0.0
        %1337 = vmatpush1.msra.mxu0 0.0
        %1338 = vmatprep.subr.mxu0 0.0
        %1339 = vmatpush1.msra.mxu0 0.0
        %1340 = vmatprep.subr.mxu0 0.0
        %1341 = vmatpush1.msra.mxu0 0.0
        %1342 = vmatprep.subr.mxu0 0.0
        %1343 = vmatpush1.msra.mxu0 0.0
        %1344 = vmatprep.subr.mxu0 0.0
        %1345 = vmatpush1.msra.mxu0 0.0
        %1346 = vmatprep.subr.mxu0 0.0
        %1347 = vmatpush1.msra.mxu0 0.0
        %1348 = vmatprep.subr.mxu0 0.0
        %1349 = vmatpush1.msra.mxu0 0.0
        %1350 = vmatprep.subr.mxu0 0.0
        %1351 = vmatpush1.msra.mxu0 0.0
        %1352 = vmatprep.subr.mxu0 0.0
        %1353 = vmatpush1.msra.mxu0 0.0
        %1354 = vmatprep.subr.mxu0 0.0
        %1355 = vmatpush1.msra.mxu0 0.0
        %1356 = vmatprep.subr.mxu0 0.0
        %1357 = vmatpush1.msra.mxu0 0.0
        %1358 = vmatprep.subr.mxu0 0.0
        %1359 = vmatpush1.msra.mxu0 0.0
        %1360 = vmatprep.subr.mxu0 0.0
        %1361 = vmatpush1.msra.mxu0 0.0
        %1362 = vmatprep.subr.mxu0 0.0
        %1363 = vmatpush1.msra.mxu0 0.0
        %1364 = vmatprep.subr.mxu0 0.0
        %1365 = vmatpush1.msra.mxu0 0.0
        %1366 = vmatprep.subr.mxu0 0.0
        %1367 = vmatpush1.msra.mxu0 0.0
        %1368 = vmatprep.subr.mxu0 0.0
        %1369 = vmatpush1.msra.mxu0 0.0
        %1370 = vmatprep.mubr.f32.mxu0 0.0
        %1371 = vmatmul.mubr.f32.gmra.mrb[0].mxu0 %v1304
        %v1372 = vpop.f32.mrb[0].mxu0
        %v1373 = vadd.f32 0.0, %v1372
        %v1374 = vpop.f32.mrb[0].mxu0
        %1375 = vdwg.mxu0
        %v1377 = vsel %vm849, %v936, 0
        %1379 = vmatprep.subr.mxu0 0.0
        %1380 = vmatpush1.msra.mxu0 %v238
        %1381 = vmatprep.subr.mxu0 0.0
        %1382 = vmatpush1.msra.mxu0 0.0
        %1383 = vmatprep.subr.mxu0 0.0
        %1384 = vmatpush1.msra.mxu0 0.0
        %1385 = vmatprep.subr.mxu0 0.0
        %1386 = vmatpush1.msra.mxu0 0.0
        %1387 = vmatprep.subr.mxu0 0.0
        %1388 = vmatpush1.msra.mxu0 0.0
        %1389 = vmatprep.subr.mxu0 0.0
        %1390 = vmatpush1.msra.mxu0 0.0
        %1391 = vmatprep.subr.mxu0 0.0
        %1392 = vmatpush1.msra.mxu0 0.0
        %1393 = vmatprep.subr.mxu0 0.0
        %1394 = vmatpush1.msra.mxu0 0.0
        %1395 = vmatprep.subr.mxu0 0.0
        %1396 = vmatpush1.msra.mxu0 0.0
        %1397 = vmatprep.subr.mxu0 0.0
        %1398 = vmatpush1.msra.mxu0 0.0
        %1399 = vmatprep.subr.mxu0 0.0
        %1400 = vmatpush1.msra.mxu0 0.0
        %1401 = vmatprep.subr.mxu0 0.0
        %1402 = vmatpush1.msra.mxu0 0.0
        %1403 = vmatprep.subr.mxu0 0.0
        %1404 = vmatpush1.msra.mxu0 0.0
        %1405 = vmatprep.subr.mxu0 0.0
        %1406 = vmatpush1.msra.mxu0 0.0
        %1407 = vmatprep.subr.mxu0 0.0
        %1408 = vmatpush1.msra.mxu0 0.0
        %1409 = vmatprep.subr.mxu0 0.0
        %1410 = vmatpush1.msra.mxu0 0.0
        %1411 = vmatprep.subr.mxu0 0.0
        %1412 = vmatpush1.msra.mxu0 0.0
        %1413 = vmatprep.subr.mxu0 0.0
        %1414 = vmatpush1.msra.mxu0 0.0
        %1415 = vmatprep.subr.mxu0 0.0
        %1416 = vmatpush1.msra.mxu0 0.0
        %1417 = vmatprep.subr.mxu0 0.0
        %1418 = vmatpush1.msra.mxu0 0.0
        %1419 = vmatprep.subr.mxu0 0.0
        %1420 = vmatpush1.msra.mxu0 0.0
        %1421 = vmatprep.subr.mxu0 0.0
        %1422 = vmatpush1.msra.mxu0 0.0
        %1423 = vmatprep.subr.mxu0 0.0
        %1424 = vmatpush1.msra.mxu0 0.0
        %1425 = vmatprep.subr.mxu0 0.0
        %1426 = vmatpush1.msra.mxu0 0.0
        %1427 = vmatprep.subr.mxu0 0.0
        %1428 = vmatpush1.msra.mxu0 0.0
        %1429 = vmatprep.subr.mxu0 0.0
        %1430 = vmatpush1.msra.mxu0 0.0
        %1431 = vmatprep.subr.mxu0 0.0
        %1432 = vmatpush1.msra.mxu0 0.0
        %1433 = vmatprep.subr.mxu0 0.0
        %1434 = vmatpush1.msra.mxu0 0.0
        %1435 = vmatprep.subr.mxu0 0.0
        %1436 = vmatpush1.msra.mxu0 0.0
        %1437 = vmatprep.subr.mxu0 0.0
        %1438 = vmatpush1.msra.mxu0 0.0
        %1439 = vmatprep.subr.mxu0 0.0
        %1440 = vmatpush1.msra.mxu0 0.0
        %1441 = vmatprep.subr.mxu0 0.0
        %1442 = vmatpush1.msra.mxu0 0.0
        %1443 = vmatprep.mubr.f32.mxu0 0.0
        %1444 = vmatmul.mubr.f32.gmra.mrb[0].mxu0 %v1377
        %v1445 = vpop.f32.mrb[0].mxu0
        %v1446 = vadd.f32 0.0, %v1445
        %v1447 = vpop.f32.mrb[0].mxu0
        %1448 = vdwg.mxu0
        %v1450 = vsel %vm849, %v937, 0
        %1452 = vmatprep.subr.mxu0 0.0
        %1453 = vmatpush1.msra.mxu0 %v239
        %1454 = vmatprep.subr.mxu0 0.0
        %1455 = vmatpush1.msra.mxu0 0.0
        %1456 = vmatprep.subr.mxu0 0.0
        %1457 = vmatpush1.msra.mxu0 0.0
        %1458 = vmatprep.subr.mxu0 0.0
        %1459 = vmatpush1.msra.mxu0 0.0
        %1460 = vmatprep.subr.mxu0 0.0
        %1461 = vmatpush1.msra.mxu0 0.0
        %1462 = vmatprep.subr.mxu0 0.0
        %1463 = vmatpush1.msra.mxu0 0.0
        %1464 = vmatprep.subr.mxu0 0.0
        %1465 = vmatpush1.msra.mxu0 0.0
        %1466 = vmatprep.subr.mxu0 0.0
        %1467 = vmatpush1.msra.mxu0 0.0
        %1468 = vmatprep.subr.mxu0 0.0
        %1469 = vmatpush1.msra.mxu0 0.0
        %1470 = vmatprep.subr.mxu0 0.0
        %1471 = vmatpush1.msra.mxu0 0.0
        %1472 = vmatprep.subr.mxu0 0.0
        %1473 = vmatpush1.msra.mxu0 0.0
        %1474 = vmatprep.subr.mxu0 0.0
        %1475 = vmatpush1.msra.mxu0 0.0
        %1476 = vmatprep.subr.mxu0 0.0
        %1477 = vmatpush1.msra.mxu0 0.0
        %1478 = vmatprep.subr.mxu0 0.0
        %1479 = vmatpush1.msra.mxu0 0.0
        %1480 = vmatprep.subr.mxu0 0.0
        %1481 = vmatpush1.msra.mxu0 0.0
        %1482 = vmatprep.subr.mxu0 0.0
        %1483 = vmatpush1.msra.mxu0 0.0
        %1484 = vmatprep.subr.mxu0 0.0
        %1485 = vmatpush1.msra.mxu0 0.0
        %1486 = vmatprep.subr.mxu0 0.0
        %1487 = vmatpush1.msra.mxu0 0.0
        %1488 = vmatprep.subr.mxu0 0.0
        %1489 = vmatpush1.msra.mxu0 0.0
        %1490 = vmatprep.subr.mxu0 0.0
        %1491 = vmatpush1.msra.mxu0 0.0
        %1492 = vmatprep.subr.mxu0 0.0
        %1493 = vmatpush1.msra.mxu0 0.0
        %1494 = vmatprep.subr.mxu0 0.0
        %1495 = vmatpush1.msra.mxu0 0.0
        %1496 = vmatprep.subr.mxu0 0.0
        %1497 = vmatpush1.msra.mxu0 0.0
        %1498 = vmatprep.subr.mxu0 0.0
        %1499 = vmatpush1.msra.mxu0 0.0
        %1500 = vmatprep.subr.mxu0 0.0
        %1501 = vmatpush1.msra.mxu0 0.0
        %1502 = vmatprep.subr.mxu0 0.0
        %1503 = vmatpush1.msra.mxu0 0.0
        %1504 = vmatprep.subr.mxu0 0.0
        %1505 = vmatpush1.msra.mxu0 0.0
        %1506 = vmatprep.subr.mxu0 0.0
        %1507 = vmatpush1.msra.mxu0 0.0
        %1508 = vmatprep.subr.mxu0 0.0
        %1509 = vmatpush1.msra.mxu0 0.0
        %1510 = vmatprep.subr.mxu0 0.0
        %1511 = vmatpush1.msra.mxu0 0.0
        %1512 = vmatprep.subr.mxu0 0.0
        %1513 = vmatpush1.msra.mxu0 0.0
        %1514 = vmatprep.subr.mxu0 0.0
        %1515 = vmatpush1.msra.mxu0 0.0
        %1516 = vmatprep.mubr.f32.mxu0 0.0
        %1517 = vmatmul.mubr.f32.gmra.mrb[0].mxu0 %v1450
        %v1518 = vpop.f32.mrb[0].mxu0
        %v1519 = vadd.f32 0.0, %v1518
        %v1520 = vpop.f32.mrb[0].mxu0
        %1521 = vdwg.mxu0
        %v1522 = vcombine.low %v1008, %v1154
        %v1523 = vcombine.high %v1008, %v1154
        %v1525 = vunpack.c.l.s4 1983009808
        %v1526 = vunpack.c.0.s8 %v1525
        %v1527 = vlaneseq
        %v1528 = vshrl.u32 %v1527, 7
        %v1529 = vsub.s32 %v1526, %v1528
        %v1530 = vrot.slane %v1522, %v1529
        %v1532 = vunpack.c.l.s4 1983009808
        %v1533 = vunpack.c.0.s8 %v1532
        %v1534 = vlaneseq
        %v1535 = vshrl.u32 %v1534, 7
        %v1536 = vsub.s32 %v1533, %v1535
        %v1537 = vrot.slane %v1523, %v1536
        %v1538 = vcombine.low %v1081, %v1227
        %v1539 = vcombine.high %v1081, %v1227
        %v1541 = vunpack.c.l.s4 1983009808
        %v1542 = vunpack.c.0.s8 %v1541
        %v1543 = vlaneseq
        %v1544 = vshrl.u32 %v1543, 7
        %v1545 = vsub.s32 %v1542, %v1544
        %v1546 = vrot.slane %v1538, %v1545
        %v1548 = vunpack.c.l.s4 1983009808
        %v1549 = vunpack.c.0.s8 %v1548
        %v1550 = vlaneseq
        %v1551 = vshrl.u32 %v1550, 7
        %v1552 = vsub.s32 %v1549, %v1551
        %v1553 = vrot.slane %v1539, %v1552
        %v1554 = vcombine.low %v1300, %v1446
        %v1555 = vcombine.high %v1300, %v1446
        %v1557 = vunpack.c.l.s4 1983009808
        %v1558 = vunpack.c.0.s8 %v1557
        %v1559 = vlaneseq
        %v1560 = vshrl.u32 %v1559, 7
        %v1561 = vsub.s32 %v1558, %v1560
        %v1562 = vrot.slane %v1554, %v1561
        %v1564 = vunpack.c.l.s4 1983009808
        %v1565 = vunpack.c.0.s8 %v1564
        %v1566 = vlaneseq
        %v1567 = vshrl.u32 %v1566, 7
        %v1568 = vsub.s32 %v1565, %v1567
        %v1569 = vrot.slane %v1555, %v1568
        %v1570 = vcombine.low %v1373, %v1519
        %v1571 = vcombine.high %v1373, %v1519
        %v1573 = vunpack.c.l.s4 1983009808
        %v1574 = vunpack.c.0.s8 %v1573
        %v1575 = vlaneseq
        %v1576 = vshrl.u32 %v1575, 7
        %v1577 = vsub.s32 %v1574, %v1576
        %v1578 = vrot.slane %v1570, %v1577
        %v1580 = vunpack.c.l.s4 1983009808
        %v1581 = vunpack.c.0.s8 %v1580
        %v1582 = vlaneseq
        %v1583 = vshrl.u32 %v1582, 7
        %v1584 = vsub.s32 %v1581, %v1583
        %v1585 = vrot.slane %v1571, %v1584
        %v1586 = vcombine.low %v1530, %v1546
        %v1587 = vcombine.high %v1530, %v1546
        %v1589 = vunpack.c.l.s4 1934713408
        %v1590 = vunpack.c.0.s8 %v1589
        %v1591 = vlaneseq
        %v1592 = vshrl.u32 %v1591, 7
        %v1593 = vsub.s32 %v1590, %v1592
        %v1594 = vrot.slane %v1586, %v1593
        %v1596 = vunpack.c.l.s4 1934713408
        %v1597 = vunpack.c.0.s8 %v1596
        %v1598 = vlaneseq
        %v1599 = vshrl.u32 %v1598, 7
        %v1600 = vsub.s32 %v1597, %v1599
        %v1601 = vrot.slane %v1587, %v1600
        %v1602 = vcombine.low %v1537, %v1553
        %v1603 = vcombine.high %v1537, %v1553
        %v1605 = vunpack.c.l.s4 1934713408
        %v1606 = vunpack.c.0.s8 %v1605
        %v1607 = vlaneseq
        %v1608 = vshrl.u32 %v1607, 7
        %v1609 = vsub.s32 %v1606, %v1608
        %v1610 = vrot.slane %v1602, %v1609
        %v1612 = vunpack.c.l.s4 1934713408
        %v1613 = vunpack.c.0.s8 %v1612
        %v1614 = vlaneseq
        %v1615 = vshrl.u32 %v1614, 7
        %v1616 = vsub.s32 %v1613, %v1615
        %v1617 = vrot.slane %v1603, %v1616
        %v1618 = vcombine.low %v1562, %v1578
        %v1619 = vcombine.high %v1562, %v1578
        %v1621 = vunpack.c.l.s4 1934713408
        %v1622 = vunpack.c.0.s8 %v1621
        %v1623 = vlaneseq
        %v1624 = vshrl.u32 %v1623, 7
        %v1625 = vsub.s32 %v1622, %v1624
        %v1626 = vrot.slane %v1618, %v1625
        %v1628 = vunpack.c.l.s4 1934713408
        %v1629 = vunpack.c.0.s8 %v1628
        %v1630 = vlaneseq
        %v1631 = vshrl.u32 %v1630, 7
        %v1632 = vsub.s32 %v1629, %v1631
        %v1633 = vrot.slane %v1619, %v1632
        %v1634 = vcombine.low %v1569, %v1585
        %v1635 = vcombine.high %v1569, %v1585
        %v1637 = vunpack.c.l.s4 1934713408
        %v1638 = vunpack.c.0.s8 %v1637
        %v1639 = vlaneseq
        %v1640 = vshrl.u32 %v1639, 7
        %v1641 = vsub.s32 %v1638, %v1640
        %v1642 = vrot.slane %v1634, %v1641
        %v1644 = vunpack.c.l.s4 1934713408
        %v1645 = vunpack.c.0.s8 %v1644
        %v1646 = vlaneseq
        %v1647 = vshrl.u32 %v1646, 7
        %v1648 = vsub.s32 %v1645, %v1647
        %v1649 = vrot.slane %v1635, %v1648
        %v1650 = vcombine.low %v1594, %v1626
        %v1651 = vcombine.high %v1594, %v1626
        %v1652 = vcombine.low %v1601, %v1633
        %v1653 = vcombine.high %v1601, %v1633
        %v1654 = vcombine.low %v1610, %v1642
        %v1655 = vcombine.high %v1610, %v1642
        %v1656 = vcombine.low %v1617, %v1649
        %v1657 = vcombine.high %v1617, %v1649
        %1659 = vrot.lane.b32.xlu0 %v1651, 4
        %v1660 = vpop.permute.xlu0 %1659
        %1663 = vrot.lane.b32.xlu0 %v1652, 8
        %v1664 = vpop.permute.xlu0 %1663
        %1667 = vrot.lane.b32.xlu0 %v1653, 12
        %v1668 = vpop.permute.xlu0 %1667
        %1671 = vrot.lane.b32.xlu0 %v1654, 16
        %v1672 = vpop.permute.xlu0 %1671
        %1675 = vrot.lane.b32.xlu0 %v1655, 20
        %v1676 = vpop.permute.xlu0 %1675
        %1679 = vrot.lane.b32.xlu0 %v1656, 24
        %v1680 = vpop.permute.xlu0 %1679
        %1683 = vrot.lane.b32.xlu0 %v1657, 28
        %v1684 = vpop.permute.xlu0 %1683
        %v1686 = vsel %vm240, %v1650, %v1660
        %v1687 = vsel %vm849, %v1686, %v1664
        %vm1688 = vcmask 97280
        %v1689 = vsel %vm1688, %v1687, %v1668
        %vm1690 = vcmask 130048
        %v1691 = vsel %vm1690, %v1689, %v1672
        %vm1692 = vcmask 162816
        %v1693 = vsel %vm1692, %v1691, %v1676
        %vm1694 = vcmask 195584
        %v1695 = vsel %vm1694, %v1693, %v1680
        %vm1696 = vcmask 228352
        %v1697 = vsel %vm1696, %v1695, %v1684
        %v1698 = vld [vmem:[%s2] sm:$0xff]
        %v1699 = vld [vmem:[%s2 + $0x8] sm:$0xff]
        %v1700 = vld [vmem:[%s2 + $0x10] sm:$0xff]
        %v1701 = vld [vmem:[%s2 + $0x18] sm:$0xff]
        %v1702 = vld [vmem:[%s3] sm:$0x1]
        %v1704 = vlaneseq
        %v1705 = vshrl.u32 %v1704, 7
        %v1706 = vsub.s32 0, %v1705
        %v1707 = vrot.slane %v1702, %v1706
        %vm1709 = vcmask 261120
        %v1711 = vsel %vm1709, %v1697, 0
        %1713 = vmatprep.subr.mxu0 0.0
        %1714 = vmatpush1.msra.mxu0 %v1698
        %1715 = vmatprep.subr.mxu0 0.0
        %1716 = vmatpush1.msra.mxu0 %v1699
        %1717 = vmatprep.subr.mxu0 0.0
        %1718 = vmatpush1.msra.mxu0 %v1700
        %1719 = vmatprep.subr.mxu0 0.0
        %1720 = vmatpush1.msra.mxu0 %v1701
        %1721 = vmatprep.subr.mxu0 0.0
        %1722 = vmatpush1.msra.mxu0 0.0
        %1723 = vmatprep.subr.mxu0 0.0
        %1724 = vmatpush1.msra.mxu0 0.0
        %1725 = vmatprep.subr.mxu0 0.0
        %1726 = vmatpush1.msra.mxu0 0.0
        %1727 = vmatprep.subr.mxu0 0.0
        %1728 = vmatpush1.msra.mxu0 0.0
        %1729 = vmatprep.subr.mxu0 0.0
        %1730 = vmatpush1.msra.mxu0 0.0
        %1731 = vmatprep.subr.mxu0 0.0
        %1732 = vmatpush1.msra.mxu0 0.0
        %1733 = vmatprep.subr.mxu0 0.0
        %1734 = vmatpush1.msra.mxu0 0.0
        %1735 = vmatprep.subr.mxu0 0.0
        %1736 = vmatpush1.msra.mxu0 0.0
        %1737 = vmatprep.subr.mxu0 0.0
        %1738 = vmatpush1.msra.mxu0 0.0
        %1739 = vmatprep.subr.mxu0 0.0
        %1740 = vmatpush1.msra.mxu0 0.0
        %1741 = vmatprep.subr.mxu0 0.0
        %1742 = vmatpush1.msra.mxu0 0.0
        %1743 = vmatprep.subr.mxu0 0.0
        %1744 = vmatpush1.msra.mxu0 0.0
        %1745 = vmatprep.subr.mxu0 0.0
        %1746 = vmatpush1.msra.mxu0 0.0
        %1747 = vmatprep.subr.mxu0 0.0
        %1748 = vmatpush1.msra.mxu0 0.0
        %1749 = vmatprep.subr.mxu0 0.0
        %1750 = vmatpush1.msra.mxu0 0.0
        %1751 = vmatprep.subr.mxu0 0.0
        %1752 = vmatpush1.msra.mxu0 0.0
        %1753 = vmatprep.subr.mxu0 0.0
        %1754 = vmatpush1.msra.mxu0 0.0
        %1755 = vmatprep.subr.mxu0 0.0
        %1756 = vmatpush1.msra.mxu0 0.0
        %1757 = vmatprep.subr.mxu0 0.0
        %1758 = vmatpush1.msra.mxu0 0.0
        %1759 = vmatprep.subr.mxu0 0.0
        %1760 = vmatpush1.msra.mxu0 0.0
        %1761 = vmatprep.subr.mxu0 0.0
        %1762 = vmatpush1.msra.mxu0 0.0
        %1763 = vmatprep.subr.mxu0 0.0
        %1764 = vmatpush1.msra.mxu0 0.0
        %1765 = vmatprep.subr.mxu0 0.0
        %1766 = vmatpush1.msra.mxu0 0.0
        %1767 = vmatprep.subr.mxu0 0.0
        %1768 = vmatpush1.msra.mxu0 0.0
        %1769 = vmatprep.subr.mxu0 0.0
        %1770 = vmatpush1.msra.mxu0 0.0
        %1771 = vmatprep.subr.mxu0 0.0
        %1772 = vmatpush1.msra.mxu0 0.0
        %1773 = vmatprep.subr.mxu0 0.0
        %1774 = vmatpush1.msra.mxu0 0.0
        %1775 = vmatprep.subr.mxu0 0.0
        %1776 = vmatpush1.msra.mxu0 0.0
        %1777 = vmatprep.mubr.f32.mxu0 0.0
        %1778 = vmatmul.mubr.f32.gmra.mrb[0].mxu0 %v1711
        %v1779 = vpop.f32.mrb[0].mxu0
        %v1780 = vadd.f32 %v1707, %v1779
        %v1781 = vpop.f32.mrb[0].mxu0
        %1782 = vdwg.mxu0
        %1783 = vst.msk [vmem:[%s205] sm:$0xff] %vm1709, %v1780
        %s1784 = sand.u32 %s120, 1
        %s1785 = scalar_lea.sflag [#allocation3], %s1784
        %s1786 = sand.u32 %s120, 1
        %s1787 = smul.addr %s1786, 8
        %s1788 = scalar_lea.vmem [#allocation2], %s1787
        // Predicated region
        $region37: #{attention_forward.1} parent=35 // pred_check
          %p1789 = pneg %p130
        $region38: #{attention_forward.1} parent=35 // pred_check_branch
          %1791 = sbr.rel (%p1789) target = $region40
        $region39: #{attention_forward.1} parent=35 // pred_region
          %s1793 = ssub.s32 128, 128
          %1794 = vsyncadd %s1785, %s1793
          %s1795 = smul.addr %s18, 128
          %s1796 = scalar_lea.hbm %s4, %s1795
          %s1798 = sshll.u32 %s1788, 4
          %s1799 = int_to_ptr.vmem [resolvable:$true] %s1798
          %1801 = dma.vmem_to_hbm [thread:$0]  %s1799, 128, %s1796, %s1785
        $region40: #{attention_forward.1} parent=35 // pred_fallthru
          _
      $region36: #{attention_forward.1} parent=5 // pred_fallthru
        _
      %p1802 = scmp.le.s32.totalorder 2, %s13
      // Predicated region
      $region41: #{attention_forward.1} parent=5 // pred_check
        %p1803 = pneg %p1802
      $region42: #{attention_forward.1} parent=5 // pred_check_branch
        %1805 = sbr.rel (%p1803) target = $region44
      $region43: #{attention_forward.1} parent=5 // pred_region
        %s1806 = ssub.s32 %s13, 2
        // Predicated region
        $region45: #{attention_forward.1} parent=43 // pred_check
          %p1807 = pneg %p136
        $region46: #{attention_forward.1} parent=43 // pred_check_branch
          %1809 = sbr.rel (%p1807) target = $region48
        $region47: #{attention_forward.1} parent=43 // pred_region
          %s1810 = sand.u32 %s121, 1
          %s1811 = scalar_lea.sflag [#allocation3], %s1810
          %s1812 = sand.u32 %s121, 1
          %s1813 = smul.addr %s1812, 8
          %s1814 = scalar_lea.vmem [#allocation2], %s1813
          %1815 = dma.done %s1811, 128
        $region48: #{attention_forward.1} parent=43 // pred_fallthru
          _
      $region44: #{attention_forward.1} parent=5 // pred_fallthru
        _
    $region6: #{attention_forward.1} parent=1 // loop_footer
      %s17 = sadd.s32 1, %s13
    $region7: #{attention_forward.1} parent=1 // loop_footer_branch
      %12 = sbr.rel target = $region3
    $region8: #{attention_forward.1} parent=1 // loop_exit
      _
    %1816 = vsyncpa [#allocation3], 1
    %s1817 = scalar_lea.sflag [#allocation3], 1
    %1818 = vsyncpa %s1817, 1

</llo_original>
